<compile_context>
chip_gen: v5e
topology: v5e:2x2
jax: 0.10.0
libtpu: 0.0.40
codegen_flags: <defaults>
</compile_context>

<pallas_src>
import functools

import jax
import jax.numpy as jnp
from jax import lax
from jax.experimental import pallas as pl
from jax.experimental.pallas import tpu as pltpu

_NEG_BIG = -1e30  # finite mask sentinel (exp underflows to 0; no -inf NaN poisoning)


def _finalize_rows(acc, l, m):
    """Normalize accumulated rows; fully-masked rows -> NaN (PyTorch semantics)."""
    out = acc / l  # exact divide: (tq, 1) work, once per edge tile
    # A row whose running max never left the sentinel saw only masked entries.
    fully_masked = m <= (_NEG_BIG * 0.5)
    return jnp.where(fully_masked, jnp.nan, out)


# ---------------------------------------------------------------------------
# One-pass kernel: the whole sample axis fits one tile (tk == n_samples).
# ---------------------------------------------------------------------------
def _onepass_attn_kernel(q_ref, k_ref, v_ref, ht_ref, o_ref):
    # scores[i, j] = sum_d q[i, d] * k[j, d]  -- contract on dk, no K.T relayout
    s = lax.dot_general(q_ref[...], k_ref[...], (((1,), (1,)), ((), ())),
                        preferred_element_type=jnp.float32)       # (tq, n_samples)
    s = jnp.where(ht_ref[...] != 0, s, _NEG_BIG)
    m = jnp.max(s, axis=-1, keepdims=True)
    p = jnp.exp(s - m)
    l = jnp.sum(p, axis=-1, keepdims=True)
    acc = jnp.dot(p.astype(v_ref.dtype), v_ref[...],
                  preferred_element_type=jnp.float32)
    o_ref[...] = _finalize_rows(acc, l, m).astype(o_ref.dtype)


def _onepass_attention(Q, K, V, Ht_i8, *, tq):
    n_edges, dk = Q.shape
    n_samples, d_out = V.shape
    grid_spec = pltpu.PrefetchScalarGridSpec(
        num_scalar_prefetch=0,
        grid=(n_edges // tq,),
        in_specs=[
            pl.BlockSpec((tq, dk), lambda qi: (qi, 0)),           # Q tile
            pl.BlockSpec((n_samples, dk), lambda qi: (0, 0)),     # full K (DMA'd once)
            pl.BlockSpec((n_samples, d_out), lambda qi: (0, 0)),  # full V (DMA'd once)
            pl.BlockSpec((tq, n_samples), lambda qi: (qi, 0)),    # int8 mask tile
        ],
        out_specs=pl.BlockSpec((tq, d_out), lambda qi: (qi, 0)),
    )
    return pl.pallas_call(
        _onepass_attn_kernel,
        out_shape=jax.ShapeDtypeStruct((n_edges, d_out), jnp.float32),
        grid_spec=grid_spec,
        compiler_params=pltpu.CompilerParams(
            dimension_semantics=("parallel",)),
    )(Q, K, V, Ht_i8)


# ---------------------------------------------------------------------------
# Flash-style kernel with online softmax + block-sparse skipping.
# ---------------------------------------------------------------------------
def _flash_attn_kernel(occ_ref, q_ref, k_ref, v_ref, ht_ref, o_ref,
                       m_ref, l_ref, acc_ref):
    qi = pl.program_id(0)
    ki = pl.program_id(1)
    nk = pl.num_programs(1)

    @pl.when(ki == 0)
    def _init():
        m_ref[...] = jnp.full_like(m_ref, _NEG_BIG)
        l_ref[...] = jnp.zeros_like(l_ref)
        acc_ref[...] = jnp.zeros_like(acc_ref)

    # Block-sparse skip: an all-zero incidence block contributes nothing
    # (its entries would all be exp(-1e30 - m) == 0).
    @pl.when(occ_ref[qi * nk + ki] != 0)
    def _compute():
        s = lax.dot_general(q_ref[...], k_ref[...], (((1,), (1,)), ((), ())),
                            preferred_element_type=jnp.float32)   # (tq, tk) f32
        s = jnp.where(ht_ref[...] != 0, s, _NEG_BIG)

        m_prev = m_ref[...]                                        # (tq, 1)
        m_new = jnp.maximum(m_prev, jnp.max(s, axis=-1, keepdims=True))
        alpha = jnp.exp(m_prev - m_new)
        p = jnp.exp(s - m_new)                                     # (tq, tk)
        l_ref[...] = alpha * l_ref[...] + jnp.sum(p, axis=-1, keepdims=True)
        acc_ref[...] = alpha * acc_ref[...] + jnp.dot(
            p.astype(v_ref.dtype), v_ref[...],
            preferred_element_type=jnp.float32)
        m_ref[...] = m_new

    @pl.when(ki == nk - 1)
    def _finalize():
        o_ref[...] = _finalize_rows(
            acc_ref[...], l_ref[...], m_ref[...]).astype(o_ref.dtype)


def _flash_attention(Q, K, V, Ht_i8, occ_flat, *, tq, tk):
    n_edges, dk = Q.shape
    n_samples, d_out = V.shape
    nq, nk = n_edges // tq, n_samples // tk

    grid_spec = pltpu.PrefetchScalarGridSpec(
        num_scalar_prefetch=1,                 # per-block occupancy table (SMEM)
        grid=(nq, nk),
        in_specs=[
            pl.BlockSpec((tq, dk), lambda qi, ki, occ: (qi, 0)),      # Q tile
            pl.BlockSpec((tk, dk), lambda qi, ki, occ: (ki, 0)),      # K tile
            pl.BlockSpec((tk, d_out), lambda qi, ki, occ: (ki, 0)),   # V tile
            pl.BlockSpec((tq, tk), lambda qi, ki, occ: (qi, ki)),     # int8 mask tile
        ],
        out_specs=pl.BlockSpec((tq, d_out), lambda qi, ki, occ: (qi, 0)),
        scratch_shapes=[
            pltpu.VMEM((tq, 1), jnp.float32),      # running max m
            pltpu.VMEM((tq, 1), jnp.float32),      # running sum l
            pltpu.VMEM((tq, d_out), jnp.float32),  # output accumulator
        ],
    )
    return pl.pallas_call(
        _flash_attn_kernel,
        out_shape=jax.ShapeDtypeStruct((n_edges, d_out), jnp.float32),
        grid_spec=grid_spec,
        compiler_params=pltpu.CompilerParams(
            # Edge-tile axis shards across TensorCores (v7x megacore); the
            # sample axis carries the online-softmax reduction -> arbitrary.
            dimension_semantics=("parallel", "arbitrary")),
    )(occ_flat, Q, K, V, Ht_i8)


# ---------------------------------------------------------------------------
# Public wrapper (HypergraphAttention.forward).
# ---------------------------------------------------------------------------
@functools.partial(jax.jit, static_argnames=("tq", "tk", "compute_dtype"))
def hypergraph_attention(X, Y, H, W_q, W_k, W_v, *, tq=512, tk=256,
                         compute_dtype=jnp.bfloat16):
    """HypergraphAttention.forward(X, Y, H) -> (n_edges, output_dim) float32."""
    n_samples = X.shape[0]
    n_edges = Y.shape[0]
    dk = W_q.shape[1]
    assert n_edges == n_samples, \
        "H.T mask semantics require square H (as in the PyTorch reference)"

    # Projections hoisted out of the Pallas kernel (plain XLA GEMMs, MXU peak).
    inv_scale = 1.0 / jnp.sqrt(jnp.float32(dk))
    Q = ((Y @ W_q) * inv_scale).astype(compute_dtype)   # fold 1/sqrt(dk) into Q
    K = (X @ W_k).astype(compute_dtype)
    V = (X @ W_v).astype(compute_dtype)

    Ht = H.T                                             # transpose once, here
    Ht_i8 = (Ht != 0).astype(jnp.int8)                   # int8 mask: half the DMA bytes

    tq = min(tq, n_edges)
    tk = min(tk, n_samples)
    # TODO(synk): pad ragged edge/sample counts; demo shapes tile exactly.
    assert n_edges % tq == 0 and n_samples % tk == 0
    assert tq % 32 == 0 or tq == n_edges     # int8 mask sublane tiling (32, 128)
    assert tk % 128 == 0 or tk == n_samples

    if tk == n_samples:
        # Whole sample axis fits one tile: single-pass softmax, no online
        # rescale machinery, no per-step pipeline overhead.
        return _onepass_attention(Q, K, V, Ht_i8, tq=tq)

    nq, nk = n_edges // tq, n_samples // tk
    occ = (Ht_i8.reshape(nq, tq, nk, tk) != 0).any(axis=(1, 3))   # (nq, nk)
    occ_flat = occ.reshape(-1).astype(jnp.int32)
    return _flash_attention(Q, K, V, Ht_i8, occ_flat, tq=tq, tk=tk)


# ---------------------------------------------------------------------------
# Demo / self-check.
# ---------------------------------------------------------------------------
def xavier_uniform(key, shape):
    fan_in, fan_out = shape
    bound = jnp.sqrt(6.0 / (fan_in + fan_out))
    return jax.random.uniform(key, shape, jnp.float32, -bound, bound)


def _reference(X, Y, H, W_q, W_k, W_v):
    """Pure-JAX reference with the same bf16 projections the kernel consumes."""
    dk = W_q.shape[1]
    inv_scale = 1.0 / jnp.sqrt(jnp.float32(dk))
    Qr = ((Y @ W_q) * inv_scale).astype(jnp.bfloat16).astype(jnp.float32)
    Kr = (X @ W_k).astype(jnp.bfloat16).astype(jnp.float32)
    Vr = (X @ W_v).astype(jnp.bfloat16).astype(jnp.float32)
    scores = Qr @ Kr.T
    scores = jnp.where(H.T == 0.0, -jnp.inf, scores)
    attn = jax.nn.softmax(scores, axis=-1)
    return attn @ Vr


if __name__ == "__main__":
    key = jax.random.PRNGKey(0)
    input_dim, dk, output_dim = 64, 128, 128   # output_dim multiple of 128 -> lane-dense stores

    # ---- Demo 1: small square problem -> one-pass kernel path -------------
    n1 = 256
    kx, ky, kh, kq, kk, kv, key = jax.random.split(key, 7)
    X1 = jax.random.normal(kx, (n1, input_dim), jnp.float32)
    Y1 = jax.random.normal(ky, (n1, input_dim), jnp.float32)
    H1 = (jax.random.uniform(kh, (n1, n1)) > 0.5).astype(jnp.float32)
    H1 = jnp.maximum(H1, jnp.eye(n1, dtype=jnp.float32))   # no fully-masked rows
    W_q = xavier_uniform(kq, (input_dim, dk))
    W_k = xavier_uniform(kk, (input_dim, dk))
    W_v = xavier_uniform(kv, (input_dim, output_dim))

    out1 = jax.block_until_ready(hypergraph_attention(X1, Y1, H1, W_q, W_k, W_v))
    ref1 = _reference(X1, Y1, H1, W_q, W_k, W_v)
    err1 = float(jnp.max(jnp.abs(out1 - ref1)))
    assert jnp.allclose(out1, ref1, atol=2e-2, rtol=2e-2), f"demo1 mismatch: {err1}"

    # ---- Demo 2: larger square problem -> flash path, 2x2 grid,  ----------
    # with one all-zero incidence block to exercise block-skipping.
    n2 = 512
    kx, ky, kh, key = jax.random.split(key, 4)
    X2 = jax.random.normal(kx, (n2, input_dim), jnp.float32)
    Y2 = jax.random.normal(ky, (n2, input_dim), jnp.float32)
    H2 = (jax.random.uniform(kh, (n2, n2)) > 0.6).astype(jnp.float32)
    # Zero the block H[256:, :256] (== H.T[:256, 256:]) so the (qi=0, ki=1)
    # mask tile is empty and the kernel's occupancy skip triggers.
    H2 = H2.at[256:, :256].set(0.0)
    H2 = jnp.maximum(H2, jnp.eye(n2, dtype=jnp.float32))   # keep every row valid

    out2 = jax.block_until_ready(
        hypergraph_attention(X2, Y2, H2, W_q, W_k, W_v, tq=256, tk=256))
    ref2 = _reference(X2, Y2, H2, W_q, W_k, W_v)
    err2 = float(jnp.max(jnp.abs(out2 - ref2)))
    assert jnp.allclose(out2, ref2, atol=2e-2, rtol=2e-2), f"demo2 mismatch: {err2}"

    print("KERNEL_OK")
</pallas_src>

<mosaic_0001>
module attributes {stable_mosaic.version = 11 : i64} {
  func.func @_onepass_attn_kernel(%arg0: i32, %arg1: memref<256x128xbf16, #tpu.memory_space<vmem>>, %arg2: memref<256x128xbf16, #tpu.memory_space<vmem>>, %arg3: memref<256x128xbf16, #tpu.memory_space<vmem>>, %arg4: memref<256x256xi8, #tpu.memory_space<vmem>>, %arg5: memref<256x128xf32, #tpu.memory_space<vmem>>) attributes {dimension_semantics = [#tpu.dimension_semantics<parallel>], iteration_bounds = array<i64: 1>, scalar_prefetch = 0 : i64, scratch_operands = 0 : i64, tpu.core_type = #tpu.core_type<tc>, window_params = [{transform_indices = @transform_0, window_bounds = array<i64: 256, 128>}, {pipeline_mode = #tpu.pipeline_mode<synchronous>, transform_indices = @transform_1, window_bounds = array<i64: 256, 128>}, {pipeline_mode = #tpu.pipeline_mode<synchronous>, transform_indices = @transform_2, window_bounds = array<i64: 256, 128>}, {transform_indices = @transform_3, window_bounds = array<i64: 256, 256>}, {transform_indices = @transform_4, window_bounds = array<i64: 256, 128>}]} {
    %c0 = arith.constant 0 : index
    %c0_0 = arith.constant 0 : index
    %0 = vector.load %arg1[%c0, %c0_0] : memref<256x128xbf16, #tpu.memory_space<vmem>>, vector<256x128xbf16>
    %c0_1 = arith.constant 0 : index
    %c0_2 = arith.constant 0 : index
    %1 = vector.load %arg2[%c0_1, %c0_2] : memref<256x128xbf16, #tpu.memory_space<vmem>>, vector<256x128xbf16>
    %cst = arith.constant dense<0.000000e+00> : vector<256x256xf32>
    %2 = tpu.matmul %0, %1, %cst {dimension_numbers = #tpu.dot_dimension_numbers<[1], [1], [0], [0], [0, 0, 1, 0], [], []>} : vector<256x128xbf16>, vector<256x128xbf16>, vector<256x256xf32> -> vector<256x256xf32>
    %c0_3 = arith.constant 0 : index
    %c0_4 = arith.constant 0 : index
    %3 = vector.load %arg4[%c0_3, %c0_4] : memref<256x256xi8, #tpu.memory_space<vmem>>, vector<256x256xi8>
    %c0_i8 = arith.constant 0 : i8
    %4 = vector.broadcast %c0_i8 : i8 to vector<256x256xi8>
    %5 = arith.cmpi ne, %3, %4 : vector<256x256xi8>
    %cst_5 = arith.constant -1.000000e+30 : f32
    %6 = vector.broadcast %cst_5 : f32 to vector<256x256xf32>
    %7 = arith.select %5, %2, %6 : vector<256x256xi1>, vector<256x256xf32>
    %cst_6 = arith.constant dense<0xFF800000> : vector<256xf32>
    %8 = vector.multi_reduction <maximumf>, %7, %cst_6 [1] : vector<256x256xf32> to vector<256xf32>
    %9 = vector.shape_cast %8 : vector<256xf32> to vector<256x1xf32>
    %10 = vector.broadcast %9 : vector<256x1xf32> to vector<256x256xf32>
    %11 = arith.subf %7, %10 : vector<256x256xf32>
    %12 = math.exp %11 : vector<256x256xf32>
    %cst_7 = arith.constant dense<0.000000e+00> : vector<256xf32>
    %13 = vector.multi_reduction <add>, %12, %cst_7 [1] : vector<256x256xf32> to vector<256xf32>
    %14 = vector.shape_cast %13 : vector<256xf32> to vector<256x1xf32>
    %15 = arith.truncf %12 : vector<256x256xf32> to vector<256x256xbf16>
    %c0_8 = arith.constant 0 : index
    %c0_9 = arith.constant 0 : index
    %16 = vector.load %arg3[%c0_8, %c0_9] : memref<256x128xbf16, #tpu.memory_space<vmem>>, vector<256x128xbf16>
    %cst_10 = arith.constant dense<0.000000e+00> : vector<256x128xf32>
    %17 = tpu.matmul %15, %16, %cst_10 {dimension_numbers = #tpu.dot_dimension_numbers<[1], [0], [0], [1], [0, 0, 1, 1], [], []>} : vector<256x256xbf16>, vector<256x128xbf16>, vector<256x128xf32> -> vector<256x128xf32>
    %18 = vector.broadcast %14 : vector<256x1xf32> to vector<256x128xf32>
    %19 = arith.divf %17, %18 : vector<256x128xf32>
    %cst_11 = arith.constant -5.000000e+29 : f32
    %20 = vector.broadcast %cst_11 : f32 to vector<256x1xf32>
    %21 = arith.cmpf ole, %9, %20 : vector<256x1xf32>
    %cst_12 = arith.constant 0x7FC00000 : f32
    %22 = vector.shape_cast %21 : vector<256x1xi1> to vector<256x1xi1>
    %23 = vector.broadcast %22 : vector<256x1xi1> to vector<256x128xi1>
    %24 = vector.broadcast %cst_12 : f32 to vector<256x128xf32>
    %25 = arith.select %23, %24, %19 : vector<256x128xi1>, vector<256x128xf32>
    %c0_13 = arith.constant 0 : index
    %c0_14 = arith.constant 0 : index
    %26 = vector.load %arg5[%c0_13, %c0_14] : memref<256x128xf32, #tpu.memory_space<vmem>>, vector<256x128xf32>
    tpu.vector_store %arg5[%c0_13, %c0_14], %25 {strides = array<i32>} : memref<256x128xf32, #tpu.memory_space<vmem>>, vector<256x128xf32>,
    return
  }
  func.func @transform_0(%arg0: i32) -> (i32, i32) {
    %c0_i32 = arith.constant 0 : i32
    %c0_i32_0 = arith.constant 0 : i32
    return %arg0, %c0_i32 : i32, i32
  }
  func.func @transform_1(%arg0: i32) -> (i32, i32) {
    %c0_i32 = arith.constant 0 : i32
    %c0_i32_0 = arith.constant 0 : i32
    %c0_i32_1 = arith.constant 0 : i32
    return %c0_i32, %c0_i32_0 : i32, i32
  }
  func.func @transform_2(%arg0: i32) -> (i32, i32) {
    %c0_i32 = arith.constant 0 : i32
    %c0_i32_0 = arith.constant 0 : i32
    %c0_i32_1 = arith.constant 0 : i32
    return %c0_i32, %c0_i32_0 : i32, i32
  }
  func.func @transform_3(%arg0: i32) -> (i32, i32) {
    %c0_i32 = arith.constant 0 : i32
    %c0_i32_0 = arith.constant 0 : i32
    return %arg0, %c0_i32 : i32, i32
  }
  func.func @transform_4(%arg0: i32) -> (i32, i32) {
    %c0_i32 = arith.constant 0 : i32
    %c0_i32_0 = arith.constant 0 : i32
    return %arg0, %c0_i32 : i32, i32
  }
}

</mosaic_0001>

<llo_original>
// kernel: hypergraph_attention.1
$region0: #{hypergraph_attention.1}
  #allocation0 [shape = 'u32[]', space=smem, size = 0x4, offset = 0x4, fixed_abs, tag = 'smem constant byte address 0x4 - core index']
  #allocation1 [shape = 'u32[72,128]{1,0:T(1,128)}', space=vmem, size = 0x9000, scoped, tag = 'internal scratch']
  %s0 = inlined_call_operand.vmem [shape: bf16[256,128], index: 0, kind: input, shape index: {}]
  %s1 = inlined_call_operand.vmem [shape: bf16[256,128], index: 1, kind: input, shape index: {}]
  %s2 = inlined_call_operand.vmem [shape: bf16[256,128], index: 2, kind: input, shape index: {}]
  %s3 = inlined_call_operand.vmem [shape: s8[256,256], index: 3, kind: input, shape index: {}]
  %s4 = inlined_call_operand.hbm [shape: f32[256,128], index: 4, kind: output, shape index: {}]
  %s5 = sld [smem:[#allocation0]]
  $region26: #{hypergraph_attention.1} parent=0
    _
  %s7 = ssub.s32 1, %s5
  %s8 = scalar_select 0, %s7, %s5
  $region1: #{hypergraph_attention.1} parent=0
    #allocation2 [shape = 'u8[131072]{0}', space=vmem, size = 0x20000, scoped, tag = 'output window, operand 0, single buffered']
    #allocation3 [shape = 's32[1]{0}', space=sflag, size = 0x4, scoped, tag = 'scoped memory for hypergraph_attention.1']
    %9 = vsyncpa [#allocation3], 0
    // Predicated region
    $region2: #{hypergraph_attention.1} parent=1 // pred_check
      _
    $region3: #{hypergraph_attention.1} parent=1 // pred_check_branch
      %11 = sbr.rel (0) target = $region5
    $region4: #{hypergraph_attention.1} parent=1 // pred_region
      _
    $region5: #{hypergraph_attention.1} parent=1 // pred_fallthru
      _
    // Predicated region
    $region6: #{hypergraph_attention.1} parent=1 // pred_check
      _
    $region7: #{hypergraph_attention.1} parent=1 // pred_check_branch
      %13 = sbr.rel (0) target = $region9
    $region8: #{hypergraph_attention.1} parent=1 // pred_region
      _
    $region9: #{hypergraph_attention.1} parent=1 // pred_fallthru
      _
    // Predicated region
    $region10: #{hypergraph_attention.1} parent=1 // pred_check
      _
    $region11: #{hypergraph_attention.1} parent=1 // pred_check_branch
      %15 = sbr.rel (0) target = $region13
    $region12: #{hypergraph_attention.1} parent=1 // pred_region
      _
    $region13: #{hypergraph_attention.1} parent=1 // pred_fallthru
      _
    // Predicated region
    $region14: #{hypergraph_attention.1} parent=1 // pred_check
      _
    $region15: #{hypergraph_attention.1} parent=1 // pred_check_branch
      %17 = sbr.rel (0) target = $region17
    $region16: #{hypergraph_attention.1} parent=1 // pred_region
      _
    $region17: #{hypergraph_attention.1} parent=1 // pred_fallthru
      _
    %v20 = vld [vmem:[%s0] sm:$0xf]
    %v21 = vld [vmem:[%s0 + $0x4] sm:$0xf]
    %v22 = vld [vmem:[%s0 + $0x8] sm:$0xf]
    %v23 = vld [vmem:[%s0 + $0xc] sm:$0xf]
    %v24 = vld [vmem:[%s0 + $0x10] sm:$0xf]
    %v25 = vld [vmem:[%s0 + $0x14] sm:$0xf]
    %v26 = vld [vmem:[%s0 + $0x18] sm:$0xf]
    %v27 = vld [vmem:[%s0 + $0x1c] sm:$0xf]
    %v28 = vld [vmem:[%s0 + $0x20] sm:$0xf]
    %v29 = vld [vmem:[%s0 + $0x24] sm:$0xf]
    %v30 = vld [vmem:[%s0 + $0x28] sm:$0xf]
    %v31 = vld [vmem:[%s0 + $0x2c] sm:$0xf]
    %v32 = vld [vmem:[%s0 + $0x30] sm:$0xf]
    %v33 = vld [vmem:[%s0 + $0x34] sm:$0xf]
    %v34 = vld [vmem:[%s0 + $0x38] sm:$0xf]
    %v35 = vld [vmem:[%s0 + $0x3c] sm:$0xf]
    %v36 = vld [vmem:[%s0 + $0x40] sm:$0xf]
    %v37 = vld [vmem:[%s0 + $0x44] sm:$0xf]
    %v38 = vld [vmem:[%s0 + $0x48] sm:$0xf]
    %v39 = vld [vmem:[%s0 + $0x4c] sm:$0xf]
    %v40 = vld [vmem:[%s0 + $0x50] sm:$0xf]
    %v41 = vld [vmem:[%s0 + $0x54] sm:$0xf]
    %v42 = vld [vmem:[%s0 + $0x58] sm:$0xf]
    %v43 = vld [vmem:[%s0 + $0x5c] sm:$0xf]
    %v44 = vld [vmem:[%s0 + $0x60] sm:$0xf]
    %v45 = vld [vmem:[%s0 + $0x64] sm:$0xf]
    %v46 = vld [vmem:[%s0 + $0x68] sm:$0xf]
    %v47 = vld [vmem:[%s0 + $0x6c] sm:$0xf]
    %v48 = vld [vmem:[%s0 + $0x70] sm:$0xf]
    %v49 = vld [vmem:[%s0 + $0x74] sm:$0xf]
    %v50 = vld [vmem:[%s0 + $0x78] sm:$0xf]
    %v51 = vld [vmem:[%s0 + $0x7c] sm:$0xf]
    %v52 = vld [vmem:[%s1] sm:$0xf]
    %v53 = vld [vmem:[%s1 + $0x4] sm:$0xf]
    %v54 = vld [vmem:[%s1 + $0x8] sm:$0xf]
    %v55 = vld [vmem:[%s1 + $0xc] sm:$0xf]
    %v56 = vld [vmem:[%s1 + $0x10] sm:$0xf]
    %v57 = vld [vmem:[%s1 + $0x14] sm:$0xf]
    %v58 = vld [vmem:[%s1 + $0x18] sm:$0xf]
    %v59 = vld [vmem:[%s1 + $0x1c] sm:$0xf]
    %v60 = vld [vmem:[%s1 + $0x20] sm:$0xf]
    %v61 = vld [vmem:[%s1 + $0x24] sm:$0xf]
    %v62 = vld [vmem:[%s1 + $0x28] sm:$0xf]
    %v63 = vld [vmem:[%s1 + $0x2c] sm:$0xf]
    %v64 = vld [vmem:[%s1 + $0x30] sm:$0xf]
    %v65 = vld [vmem:[%s1 + $0x34] sm:$0xf]
    %v66 = vld [vmem:[%s1 + $0x38] sm:$0xf]
    %v67 = vld [vmem:[%s1 + $0x3c] sm:$0xf]
    %v68 = vld [vmem:[%s1 + $0x40] sm:$0xf]
    %v69 = vld [vmem:[%s1 + $0x44] sm:$0xf]
    %v70 = vld [vmem:[%s1 + $0x48] sm:$0xf]
    %v71 = vld [vmem:[%s1 + $0x4c] sm:$0xf]
    %v72 = vld [vmem:[%s1 + $0x50] sm:$0xf]
    %v73 = vld [vmem:[%s1 + $0x54] sm:$0xf]
    %v74 = vld [vmem:[%s1 + $0x58] sm:$0xf]
    %v75 = vld [vmem:[%s1 + $0x5c] sm:$0xf]
    %v76 = vld [vmem:[%s1 + $0x60] sm:$0xf]
    %v77 = vld [vmem:[%s1 + $0x64] sm:$0xf]
    %v78 = vld [vmem:[%s1 + $0x68] sm:$0xf]
    %v79 = vld [vmem:[%s1 + $0x6c] sm:$0xf]
    %v80 = vld [vmem:[%s1 + $0x70] sm:$0xf]
    %v81 = vld [vmem:[%s1 + $0x74] sm:$0xf]
    %v82 = vld [vmem:[%s1 + $0x78] sm:$0xf]
    %v83 = vld [vmem:[%s1 + $0x7c] sm:$0xf]
    %v116 = vunpack.c.l.b16 %v20
    %v117 = vunpack.c.l.b16 %v21
    %v118 = vunpack.c.l.b16 %v22
    %v119 = vunpack.c.l.b16 %v23
    %v120 = vunpack.c.l.b16 %v24
    %v121 = vunpack.c.l.b16 %v25
    %v122 = vunpack.c.l.b16 %v26
    %v123 = vunpack.c.l.b16 %v27
    %v124 = vunpack.c.l.b16 %v28
    %v125 = vunpack.c.l.b16 %v29
    %v126 = vunpack.c.l.b16 %v30
    %v127 = vunpack.c.l.b16 %v31
    %v128 = vunpack.c.l.b16 %v32
    %v129 = vunpack.c.l.b16 %v33
    %v130 = vunpack.c.l.b16 %v34
    %v131 = vunpack.c.l.b16 %v35
    %v132 = vunpack.c.l.b16 %v36
    %v133 = vunpack.c.l.b16 %v37
    %v134 = vunpack.c.l.b16 %v38
    %v135 = vunpack.c.l.b16 %v39
    %v136 = vunpack.c.l.b16 %v40
    %v137 = vunpack.c.l.b16 %v41
    %v138 = vunpack.c.l.b16 %v42
    %v139 = vunpack.c.l.b16 %v43
    %v140 = vunpack.c.l.b16 %v44
    %v141 = vunpack.c.l.b16 %v45
    %v142 = vunpack.c.l.b16 %v46
    %v143 = vunpack.c.l.b16 %v47
    %v144 = vunpack.c.l.b16 %v48
    %v145 = vunpack.c.l.b16 %v49
    %v146 = vunpack.c.l.b16 %v50
    %v147 = vunpack.c.l.b16 %v51
    %v148 = vpack.c.b16 %v117, %v116
    %v149 = vpack.c.b16 %v119, %v118
    %v150 = vpack.c.b16 %v121, %v120
    %v151 = vpack.c.b16 %v123, %v122
    %v152 = vpack.c.b16 %v125, %v124
    %v153 = vpack.c.b16 %v127, %v126
    %v154 = vpack.c.b16 %v129, %v128
    %v155 = vpack.c.b16 %v131, %v130
    %v156 = vpack.c.b16 %v133, %v132
    %v157 = vpack.c.b16 %v135, %v134
    %v158 = vpack.c.b16 %v137, %v136
    %v159 = vpack.c.b16 %v139, %v138
    %v160 = vpack.c.b16 %v141, %v140
    %v161 = vpack.c.b16 %v143, %v142
    %v162 = vpack.c.b16 %v145, %v144
    %v163 = vpack.c.b16 %v147, %v146
    %v212 = vunpack.c.l.b16 %v52
    %v213 = vunpack.c.l.b16 %v53
    %v214 = vunpack.c.l.b16 %v54
    %v215 = vunpack.c.l.b16 %v55
    %v216 = vunpack.c.l.b16 %v56
    %v217 = vunpack.c.l.b16 %v57
    %v218 = vunpack.c.l.b16 %v58
    %v219 = vunpack.c.l.b16 %v59
    %v220 = vunpack.c.l.b16 %v60
    %v221 = vunpack.c.l.b16 %v61
    %v222 = vunpack.c.l.b16 %v62
    %v223 = vunpack.c.l.b16 %v63
    %v224 = vunpack.c.l.b16 %v64
    %v225 = vunpack.c.l.b16 %v65
    %v226 = vunpack.c.l.b16 %v66
    %v227 = vunpack.c.l.b16 %v67
    %v228 = vunpack.c.l.b16 %v68
    %v229 = vunpack.c.l.b16 %v69
    %v230 = vunpack.c.l.b16 %v70
    %v231 = vunpack.c.l.b16 %v71
    %v232 = vunpack.c.l.b16 %v72
    %v233 = vunpack.c.l.b16 %v73
    %v234 = vunpack.c.l.b16 %v74
    %v235 = vunpack.c.l.b16 %v75
    %v236 = vunpack.c.l.b16 %v76
    %v237 = vunpack.c.l.b16 %v77
    %v238 = vunpack.c.l.b16 %v78
    %v239 = vunpack.c.l.b16 %v79
    %v240 = vunpack.c.l.b16 %v80
    %v241 = vunpack.c.l.b16 %v81
    %v242 = vunpack.c.l.b16 %v82
    %v243 = vunpack.c.l.b16 %v83
    %v244 = vpack.c.b16 %v213, %v212
    %v245 = vpack.c.b16 %v215, %v214
    %v246 = vpack.c.b16 %v217, %v216
    %v247 = vpack.c.b16 %v219, %v218
    %v248 = vpack.c.b16 %v221, %v220
    %v249 = vpack.c.b16 %v223, %v222
    %v250 = vpack.c.b16 %v225, %v224
    %v251 = vpack.c.b16 %v227, %v226
    %v252 = vpack.c.b16 %v229, %v228
    %v253 = vpack.c.b16 %v231, %v230
    %v254 = vpack.c.b16 %v233, %v232
    %v255 = vpack.c.b16 %v235, %v234
    %v256 = vpack.c.b16 %v237, %v236
    %v257 = vpack.c.b16 %v239, %v238
    %v258 = vpack.c.b16 %v241, %v240
    %v259 = vpack.c.b16 %v243, %v242
    %276 = vmatpush.bf16.xpose.msra.mxu0 %v251
    %277 = vmatpush.bf16.xpose.msra.mxu0 %v250
    %278 = vmatpush.bf16.xpose.msra.mxu0 %v249
    %279 = vmatpush.bf16.xpose.msra.mxu0 %v248
    %280 = vmatpush.bf16.xpose.msra.mxu0 %v247
    %281 = vmatpush.bf16.xpose.msra.mxu0 %v246
    %282 = vmatpush.bf16.xpose.msra.mxu0 %v245
    %283 = vmatpush.bf16.xpose.msra.mxu0 %v244
    %284 = vmatmul.bf16.gmra.mxu0 %v148
    %v285 = vpop.f32.mrf.mxu0
    %v286 = vadd.f32 0.0, %v285
    %v287 = vpop.f32.mrf.mxu0
    %v288 = vadd.f32 0.0, %v287
    %289 = vmatmul.bf16.gmra.mxu0 %v149
    %v290 = vpop.f32.mrf.mxu0
    %v291 = vadd.f32 0.0, %v290
    %v292 = vpop.f32.mrf.mxu0
    %v293 = vadd.f32 0.0, %v292
    %294 = vmatmul.bf16.gmra.mxu0 %v150
    %v295 = vpop.f32.mrf.mxu0
    %v296 = vadd.f32 0.0, %v295
    %v297 = vpop.f32.mrf.mxu0
    %v298 = vadd.f32 0.0, %v297
    %299 = vmatmul.bf16.gmra.mxu0 %v151
    %v300 = vpop.f32.mrf.mxu0
    %v301 = vadd.f32 0.0, %v300
    %v302 = vpop.f32.mrf.mxu0
    %v303 = vadd.f32 0.0, %v302
    %304 = vmatmul.bf16.gmra.mxu0 %v152
    %v305 = vpop.f32.mrf.mxu0
    %v306 = vadd.f32 0.0, %v305
    %v307 = vpop.f32.mrf.mxu0
    %v308 = vadd.f32 0.0, %v307
    %309 = vmatmul.bf16.gmra.mxu0 %v153
    %v310 = vpop.f32.mrf.mxu0
    %v311 = vadd.f32 0.0, %v310
    %v312 = vpop.f32.mrf.mxu0
    %v313 = vadd.f32 0.0, %v312
    %314 = vmatmul.bf16.gmra.mxu0 %v154
    %v315 = vpop.f32.mrf.mxu0
    %v316 = vadd.f32 0.0, %v315
    %v317 = vpop.f32.mrf.mxu0
    %v318 = vadd.f32 0.0, %v317
    %319 = vmatmul.bf16.gmra.mxu0 %v155
    %v320 = vpop.f32.mrf.mxu0
    %v321 = vadd.f32 0.0, %v320
    %v322 = vpop.f32.mrf.mxu0
    %v323 = vadd.f32 0.0, %v322
    %324 = vmatmul.bf16.gmra.mxu0 %v156
    %v325 = vpop.f32.mrf.mxu0
    %v326 = vadd.f32 0.0, %v325
    %v327 = vpop.f32.mrf.mxu0
    %v328 = vadd.f32 0.0, %v327
    %329 = vmatmul.bf16.gmra.mxu0 %v157
    %v330 = vpop.f32.mrf.mxu0
    %v331 = vadd.f32 0.0, %v330
    %v332 = vpop.f32.mrf.mxu0
    %v333 = vadd.f32 0.0, %v332
    %334 = vmatmul.bf16.gmra.mxu0 %v158
    %v335 = vpop.f32.mrf.mxu0
    %v336 = vadd.f32 0.0, %v335
    %v337 = vpop.f32.mrf.mxu0
    %v338 = vadd.f32 0.0, %v337
    %339 = vmatmul.bf16.gmra.mxu0 %v159
    %v340 = vpop.f32.mrf.mxu0
    %v341 = vadd.f32 0.0, %v340
    %v342 = vpop.f32.mrf.mxu0
    %v343 = vadd.f32 0.0, %v342
    %344 = vmatmul.bf16.gmra.mxu0 %v160
    %v345 = vpop.f32.mrf.mxu0
    %v346 = vadd.f32 0.0, %v345
    %v347 = vpop.f32.mrf.mxu0
    %v348 = vadd.f32 0.0, %v347
    %349 = vmatmul.bf16.gmra.mxu0 %v161
    %v350 = vpop.f32.mrf.mxu0
    %v351 = vadd.f32 0.0, %v350
    %v352 = vpop.f32.mrf.mxu0
    %v353 = vadd.f32 0.0, %v352
    %354 = vmatmul.bf16.gmra.mxu0 %v162
    %v355 = vpop.f32.mrf.mxu0
    %v356 = vadd.f32 0.0, %v355
    %v357 = vpop.f32.mrf.mxu0
    %v358 = vadd.f32 0.0, %v357
    %359 = vmatmul.bf16.gmra.mxu0 %v163
    %v360 = vpop.f32.mrf.mxu0
    %v361 = vadd.f32 0.0, %v360
    %v362 = vpop.f32.mrf.mxu0
    %v363 = vadd.f32 0.0, %v362
    %364 = vdwg.mxu0
    %365 = vmatpush.bf16.xpose.msra.mxu0 %v259
    %366 = vmatpush.bf16.xpose.msra.mxu0 %v258
    %367 = vmatpush.bf16.xpose.msra.mxu0 %v257
    %368 = vmatpush.bf16.xpose.msra.mxu0 %v256
    %369 = vmatpush.bf16.xpose.msra.mxu0 %v255
    %370 = vmatpush.bf16.xpose.msra.mxu0 %v254
    %371 = vmatpush.bf16.xpose.msra.mxu0 %v253
    %372 = vmatpush.bf16.xpose.msra.mxu0 %v252
    %373 = vmatmul.bf16.gmra.mxu0 %v148
    %v374 = vpop.f32.mrf.mxu0
    %v375 = vadd.f32 0.0, %v374
    %v376 = vpop.f32.mrf.mxu0
    %v377 = vadd.f32 0.0, %v376
    %378 = vmatmul.bf16.gmra.mxu0 %v149
    %v379 = vpop.f32.mrf.mxu0
    %v380 = vadd.f32 0.0, %v379
    %v381 = vpop.f32.mrf.mxu0
    %v382 = vadd.f32 0.0, %v381
    %383 = vmatmul.bf16.gmra.mxu0 %v150
    %v384 = vpop.f32.mrf.mxu0
    %v385 = vadd.f32 0.0, %v384
    %v386 = vpop.f32.mrf.mxu0
    %v387 = vadd.f32 0.0, %v386
    %388 = vmatmul.bf16.gmra.mxu0 %v151
    %v389 = vpop.f32.mrf.mxu0
    %v390 = vadd.f32 0.0, %v389
    %v391 = vpop.f32.mrf.mxu0
    %v392 = vadd.f32 0.0, %v391
    %393 = vmatmul.bf16.gmra.mxu0 %v152
    %v394 = vpop.f32.mrf.mxu0
    %v395 = vadd.f32 0.0, %v394
    %v396 = vpop.f32.mrf.mxu0
    %v397 = vadd.f32 0.0, %v396
    %398 = vmatmul.bf16.gmra.mxu0 %v153
    %v399 = vpop.f32.mrf.mxu0
    %v400 = vadd.f32 0.0, %v399
    %v401 = vpop.f32.mrf.mxu0
    %v402 = vadd.f32 0.0, %v401
    %403 = vmatmul.bf16.gmra.mxu0 %v154
    %v404 = vpop.f32.mrf.mxu0
    %v405 = vadd.f32 0.0, %v404
    %v406 = vpop.f32.mrf.mxu0
    %v407 = vadd.f32 0.0, %v406
    %408 = vmatmul.bf16.gmra.mxu0 %v155
    %v409 = vpop.f32.mrf.mxu0
    %v410 = vadd.f32 0.0, %v409
    %v411 = vpop.f32.mrf.mxu0
    %v412 = vadd.f32 0.0, %v411
    %413 = vmatmul.bf16.gmra.mxu0 %v156
    %v414 = vpop.f32.mrf.mxu0
    %v415 = vadd.f32 0.0, %v414
    %v416 = vpop.f32.mrf.mxu0
    %v417 = vadd.f32 0.0, %v416
    %418 = vmatmul.bf16.gmra.mxu0 %v157
    %v419 = vpop.f32.mrf.mxu0
    %v420 = vadd.f32 0.0, %v419
    %v421 = vpop.f32.mrf.mxu0
    %v422 = vadd.f32 0.0, %v421
    %423 = vmatmul.bf16.gmra.mxu0 %v158
    %v424 = vpop.f32.mrf.mxu0
    %v425 = vadd.f32 0.0, %v424
    %v426 = vpop.f32.mrf.mxu0
    %v427 = vadd.f32 0.0, %v426
    %428 = vmatmul.bf16.gmra.mxu0 %v159
    %v429 = vpop.f32.mrf.mxu0
    %v430 = vadd.f32 0.0, %v429
    %v431 = vpop.f32.mrf.mxu0
    %v432 = vadd.f32 0.0, %v431
    %433 = vmatmul.bf16.gmra.mxu0 %v160
    %v434 = vpop.f32.mrf.mxu0
    %v435 = vadd.f32 0.0, %v434
    %v436 = vpop.f32.mrf.mxu0
    %v437 = vadd.f32 0.0, %v436
    %438 = vmatmul.bf16.gmra.mxu0 %v161
    %v439 = vpop.f32.mrf.mxu0
    %v440 = vadd.f32 0.0, %v439
    %v441 = vpop.f32.mrf.mxu0
    %v442 = vadd.f32 0.0, %v441
    %443 = vmatmul.bf16.gmra.mxu0 %v162
    %v444 = vpop.f32.mrf.mxu0
    %v445 = vadd.f32 0.0, %v444
    %v446 = vpop.f32.mrf.mxu0
    %v447 = vadd.f32 0.0, %v446
    %448 = vmatmul.bf16.gmra.mxu0 %v163
    %v449 = vpop.f32.mrf.mxu0
    %v450 = vadd.f32 0.0, %v449
    %v451 = vpop.f32.mrf.mxu0
    %v452 = vadd.f32 0.0, %v451
    %453 = vdwg.mxu0
    %v454 = vld [vmem:[%s3] sm:$0xff]
    %v455 = vld [vmem:[%s3 + $0x8] sm:$0xff]
    %v456 = vld [vmem:[%s3 + $0x10] sm:$0xff]
    %v457 = vld [vmem:[%s3 + $0x18] sm:$0xff]
    %v458 = vld [vmem:[%s3 + $0x20] sm:$0xff]
    %v459 = vld [vmem:[%s3 + $0x28] sm:$0xff]
    %v460 = vld [vmem:[%s3 + $0x30] sm:$0xff]
    %v461 = vld [vmem:[%s3 + $0x38] sm:$0xff]
    %v462 = vld [vmem:[%s3 + $0x40] sm:$0xff]
    %v463 = vld [vmem:[%s3 + $0x48] sm:$0xff]
    %v464 = vld [vmem:[%s3 + $0x50] sm:$0xff]
    %v465 = vld [vmem:[%s3 + $0x58] sm:$0xff]
    %v466 = vld [vmem:[%s3 + $0x60] sm:$0xff]
    %v467 = vld [vmem:[%s3 + $0x68] sm:$0xff]
    %v468 = vld [vmem:[%s3 + $0x70] sm:$0xff]
    %v469 = vld [vmem:[%s3 + $0x78] sm:$0xff]
    %vm470 = vnez %v454
    %vm471 = vnez %v455
    %vm472 = vnez %v456
    %vm473 = vnez %v457
    %vm474 = vnez %v458
    %vm475 = vnez %v459
    %vm476 = vnez %v460
    %vm477 = vnez %v461
    %vm478 = vnez %v462
    %vm479 = vnez %v463
    %vm480 = vnez %v464
    %vm481 = vnez %v465
    %vm482 = vnez %v466
    %vm483 = vnez %v467
    %vm484 = vnez %v468
    %vm485 = vnez %v469
    %v486 = vsel %vm470, 16843009, 0
    %v487 = vsel %vm471, 16843009, 0
    %v488 = vsel %vm472, 16843009, 0
    %v489 = vsel %vm473, 16843009, 0
    %v490 = vsel %vm474, 16843009, 0
    %v491 = vsel %vm475, 16843009, 0
    %v492 = vsel %vm476, 16843009, 0
    %v493 = vsel %vm477, 16843009, 0
    %v494 = vsel %vm478, 16843009, 0
    %v495 = vsel %vm479, 16843009, 0
    %v496 = vsel %vm480, 16843009, 0
    %v497 = vsel %vm481, 16843009, 0
    %v498 = vsel %vm482, 16843009, 0
    %v499 = vsel %vm483, 16843009, 0
    %v500 = vsel %vm484, 16843009, 0
    %v501 = vsel %vm485, 16843009, 0
    %v502 = vunpack.c.0.s8 %v486
    %v503 = vunpack.c.0.s8 %v487
    %v504 = vunpack.c.1.s8 %v486
    %v505 = vunpack.c.1.s8 %v487
    %v506 = vunpack.c.2.s8 %v486
    %v507 = vunpack.c.2.s8 %v487
    %v508 = vunpack.c.3.s8 %v486
    %v509 = vunpack.c.3.s8 %v487
    %v510 = vunpack.c.0.s8 %v488
    %v511 = vunpack.c.0.s8 %v489
    %v512 = vunpack.c.1.s8 %v488
    %v513 = vunpack.c.1.s8 %v489
    %v514 = vunpack.c.2.s8 %v488
    %v515 = vunpack.c.2.s8 %v489
    %v516 = vunpack.c.3.s8 %v488
    %v517 = vunpack.c.3.s8 %v489
    %v518 = vunpack.c.0.s8 %v490
    %v519 = vunpack.c.0.s8 %v491
    %v520 = vunpack.c.1.s8 %v490
    %v521 = vunpack.c.1.s8 %v491
    %v522 = vunpack.c.2.s8 %v490
    %v523 = vunpack.c.2.s8 %v491
    %v524 = vunpack.c.3.s8 %v490
    %v525 = vunpack.c.3.s8 %v491
    %v526 = vunpack.c.0.s8 %v492
    %v527 = vunpack.c.0.s8 %v493
    %v528 = vunpack.c.1.s8 %v492
    %v529 = vunpack.c.1.s8 %v493
    %v530 = vunpack.c.2.s8 %v492
    %v531 = vunpack.c.2.s8 %v493
    %v532 = vunpack.c.3.s8 %v492
    %v533 = vunpack.c.3.s8 %v493
    %v534 = vunpack.c.0.s8 %v494
    %v535 = vunpack.c.0.s8 %v495
    %v536 = vunpack.c.1.s8 %v494
    %v537 = vunpack.c.1.s8 %v495
    %v538 = vunpack.c.2.s8 %v494
    %v539 = vunpack.c.2.s8 %v495
    %v540 = vunpack.c.3.s8 %v494
    %v541 = vunpack.c.3.s8 %v495
    %v542 = vunpack.c.0.s8 %v496
    %v543 = vunpack.c.0.s8 %v497
    %v544 = vunpack.c.1.s8 %v496
    %v545 = vunpack.c.1.s8 %v497
    %v546 = vunpack.c.2.s8 %v496
    %v547 = vunpack.c.2.s8 %v497
    %v548 = vunpack.c.3.s8 %v496
    %v549 = vunpack.c.3.s8 %v497
    %v550 = vunpack.c.0.s8 %v498
    %v551 = vunpack.c.0.s8 %v499
    %v552 = vunpack.c.1.s8 %v498
    %v553 = vunpack.c.1.s8 %v499
    %v554 = vunpack.c.2.s8 %v498
    %v555 = vunpack.c.2.s8 %v499
    %v556 = vunpack.c.3.s8 %v498
    %v557 = vunpack.c.3.s8 %v499
    %v558 = vunpack.c.0.s8 %v500
    %v559 = vunpack.c.0.s8 %v501
    %v560 = vunpack.c.1.s8 %v500
    %v561 = vunpack.c.1.s8 %v501
    %v562 = vunpack.c.2.s8 %v500
    %v563 = vunpack.c.2.s8 %v501
    %v564 = vunpack.c.3.s8 %v500
    %v565 = vunpack.c.3.s8 %v501
    %v566 = vpack.c.b16 %v503, %v502
    %v567 = vpack.c.b8 %v566, %v566
    %v568 = vpack.c.b16 %v505, %v504
    %v569 = vpack.c.b8 %v568, %v568
    %v570 = vpack.c.b16 %v507, %v506
    %v571 = vpack.c.b8 %v570, %v570
    %v572 = vpack.c.b16 %v509, %v508
    %v573 = vpack.c.b8 %v572, %v572
    %v574 = vpack.c.b16 %v511, %v510
    %v575 = vpack.c.b8 %v574, %v574
    %v576 = vpack.c.b16 %v513, %v512
    %v577 = vpack.c.b8 %v576, %v576
    %v578 = vpack.c.b16 %v515, %v514
    %v579 = vpack.c.b8 %v578, %v578
    %v580 = vpack.c.b16 %v517, %v516
    %v581 = vpack.c.b8 %v580, %v580
    %v582 = vpack.c.b16 %v519, %v518
    %v583 = vpack.c.b8 %v582, %v582
    %v584 = vpack.c.b16 %v521, %v520
    %v585 = vpack.c.b8 %v584, %v584
    %v586 = vpack.c.b16 %v523, %v522
    %v587 = vpack.c.b8 %v586, %v586
    %v588 = vpack.c.b16 %v525, %v524
    %v589 = vpack.c.b8 %v588, %v588
    %v590 = vpack.c.b16 %v527, %v526
    %v591 = vpack.c.b8 %v590, %v590
    %v592 = vpack.c.b16 %v529, %v528
    %v593 = vpack.c.b8 %v592, %v592
    %v594 = vpack.c.b16 %v531, %v530
    %v595 = vpack.c.b8 %v594, %v594
    %v596 = vpack.c.b16 %v533, %v532
    %v597 = vpack.c.b8 %v596, %v596
    %v598 = vpack.c.b16 %v535, %v534
    %v599 = vpack.c.b8 %v598, %v598
    %v600 = vpack.c.b16 %v537, %v536
    %v601 = vpack.c.b8 %v600, %v600
    %v602 = vpack.c.b16 %v539, %v538
    %v603 = vpack.c.b8 %v602, %v602
    %v604 = vpack.c.b16 %v541, %v540
    %v605 = vpack.c.b8 %v604, %v604
    %v606 = vpack.c.b16 %v543, %v542
    %v607 = vpack.c.b8 %v606, %v606
    %v608 = vpack.c.b16 %v545, %v544
    %v609 = vpack.c.b8 %v608, %v608
    %v610 = vpack.c.b16 %v547, %v546
    %v611 = vpack.c.b8 %v610, %v610
    %v612 = vpack.c.b16 %v549, %v548
    %v613 = vpack.c.b8 %v612, %v612
    %v614 = vpack.c.b16 %v551, %v550
    %v615 = vpack.c.b8 %v614, %v614
    %v616 = vpack.c.b16 %v553, %v552
    %v617 = vpack.c.b8 %v616, %v616
    %v618 = vpack.c.b16 %v555, %v554
    %v619 = vpack.c.b8 %v618, %v618
    %v620 = vpack.c.b16 %v557, %v556
    %v621 = vpack.c.b8 %v620, %v620
    %v622 = vpack.c.b16 %v559, %v558
    %v623 = vpack.c.b8 %v622, %v622
    %v624 = vpack.c.b16 %v561, %v560
    %v625 = vpack.c.b8 %v624, %v624
    %v626 = vpack.c.b16 %v563, %v562
    %v627 = vpack.c.b8 %v626, %v626
    %v628 = vpack.c.b16 %v565, %v564
    %v629 = vpack.c.b8 %v628, %v628
    %vm630 = vnez %v567
    %vm631 = vnez %v569
    %vm632 = vnez %v571
    %vm633 = vnez %v573
    %vm634 = vnez %v575
    %vm635 = vnez %v577
    %vm636 = vnez %v579
    %vm637 = vnez %v581
    %vm638 = vnez %v583
    %vm639 = vnez %v585
    %vm640 = vnez %v587
    %vm641 = vnez %v589
    %vm642 = vnez %v591
    %vm643 = vnez %v593
    %vm644 = vnez %v595
    %vm645 = vnez %v597
    %vm646 = vnez %v599
    %vm647 = vnez %v601
    %vm648 = vnez %v603
    %vm649 = vnez %v605
    %vm650 = vnez %v607
    %vm651 = vnez %v609
    %vm652 = vnez %v611
    %vm653 = vnez %v613
    %vm654 = vnez %v615
    %vm655 = vnez %v617
    %vm656 = vnez %v619
    %vm657 = vnez %v621
    %vm658 = vnez %v623
    %vm659 = vnez %v625
    %vm660 = vnez %v627
    %vm661 = vnez %v629
    %v662 = vsel %vm630, 16843009, 0
    %v663 = vsel %vm631, 16843009, 0
    %v664 = vsel %vm632, 16843009, 0
    %v665 = vsel %vm633, 16843009, 0
    %v666 = vsel %vm634, 16843009, 0
    %v667 = vsel %vm635, 16843009, 0
    %v668 = vsel %vm636, 16843009, 0
    %v669 = vsel %vm637, 16843009, 0
    %v670 = vsel %vm638, 16843009, 0
    %v671 = vsel %vm639, 16843009, 0
    %v672 = vsel %vm640, 16843009, 0
    %v673 = vsel %vm641, 16843009, 0
    %v674 = vsel %vm642, 16843009, 0
    %v675 = vsel %vm643, 16843009, 0
    %v676 = vsel %vm644, 16843009, 0
    %v677 = vsel %vm645, 16843009, 0
    %v678 = vsel %vm646, 16843009, 0
    %v679 = vsel %vm647, 16843009, 0
    %v680 = vsel %vm648, 16843009, 0
    %v681 = vsel %vm649, 16843009, 0
    %v682 = vsel %vm650, 16843009, 0
    %v683 = vsel %vm651, 16843009, 0
    %v684 = vsel %vm652, 16843009, 0
    %v685 = vsel %vm653, 16843009, 0
    %v686 = vsel %vm654, 16843009, 0
    %v687 = vsel %vm655, 16843009, 0
    %v688 = vsel %vm656, 16843009, 0
    %v689 = vsel %vm657, 16843009, 0
    %v690 = vsel %vm658, 16843009, 0
    %v691 = vsel %vm659, 16843009, 0
    %v692 = vsel %vm660, 16843009, 0
    %v693 = vsel %vm661, 16843009, 0
    %v694 = vunpack.c.0.s8 %v662
    %v695 = vunpack.c.1.s8 %v662
    %v696 = vunpack.c.0.s8 %v663
    %v697 = vunpack.c.1.s8 %v663
    %v698 = vunpack.c.0.s8 %v664
    %v699 = vunpack.c.1.s8 %v664
    %v700 = vunpack.c.0.s8 %v665
    %v701 = vunpack.c.1.s8 %v665
    %v702 = vunpack.c.0.s8 %v666
    %v703 = vunpack.c.1.s8 %v666
    %v704 = vunpack.c.0.s8 %v667
    %v705 = vunpack.c.1.s8 %v667
    %v706 = vunpack.c.0.s8 %v668
    %v707 = vunpack.c.1.s8 %v668
    %v708 = vunpack.c.0.s8 %v669
    %v709 = vunpack.c.1.s8 %v669
    %v710 = vunpack.c.0.s8 %v670
    %v711 = vunpack.c.1.s8 %v670
    %v712 = vunpack.c.0.s8 %v671
    %v713 = vunpack.c.1.s8 %v671
    %v714 = vunpack.c.0.s8 %v672
    %v715 = vunpack.c.1.s8 %v672
    %v716 = vunpack.c.0.s8 %v673
    %v717 = vunpack.c.1.s8 %v673
    %v718 = vunpack.c.0.s8 %v674
    %v719 = vunpack.c.1.s8 %v674
    %v720 = vunpack.c.0.s8 %v675
    %v721 = vunpack.c.1.s8 %v675
    %v722 = vunpack.c.0.s8 %v676
    %v723 = vunpack.c.1.s8 %v676
    %v724 = vunpack.c.0.s8 %v677
    %v725 = vunpack.c.1.s8 %v677
    %v726 = vunpack.c.0.s8 %v678
    %v727 = vunpack.c.1.s8 %v678
    %v728 = vunpack.c.0.s8 %v679
    %v729 = vunpack.c.1.s8 %v679
    %v730 = vunpack.c.0.s8 %v680
    %v731 = vunpack.c.1.s8 %v680
    %v732 = vunpack.c.0.s8 %v681
    %v733 = vunpack.c.1.s8 %v681
    %v734 = vunpack.c.0.s8 %v682
    %v735 = vunpack.c.1.s8 %v682
    %v736 = vunpack.c.0.s8 %v683
    %v737 = vunpack.c.1.s8 %v683
    %v738 = vunpack.c.0.s8 %v684
    %v739 = vunpack.c.1.s8 %v684
    %v740 = vunpack.c.0.s8 %v685
    %v741 = vunpack.c.1.s8 %v685
    %v742 = vunpack.c.0.s8 %v686
    %v743 = vunpack.c.1.s8 %v686
    %v744 = vunpack.c.0.s8 %v687
    %v745 = vunpack.c.1.s8 %v687
    %v746 = vunpack.c.0.s8 %v688
    %v747 = vunpack.c.1.s8 %v688
    %v748 = vunpack.c.0.s8 %v689
    %v749 = vunpack.c.1.s8 %v689
    %v750 = vunpack.c.0.s8 %v690
    %v751 = vunpack.c.1.s8 %v690
    %v752 = vunpack.c.0.s8 %v691
    %v753 = vunpack.c.1.s8 %v691
    %v754 = vunpack.c.0.s8 %v692
    %v755 = vunpack.c.1.s8 %v692
    %v756 = vunpack.c.0.s8 %v693
    %v757 = vunpack.c.1.s8 %v693
    %vm758 = vcmp.ne.s32.totalorder %v694, 0
    %vm759 = vcmp.ne.s32.totalorder %v695, 0
    %vm760 = vcmp.ne.s32.totalorder %v696, 0
    %vm761 = vcmp.ne.s32.totalorder %v697, 0
    %vm762 = vcmp.ne.s32.totalorder %v698, 0
    %vm763 = vcmp.ne.s32.totalorder %v699, 0
    %vm764 = vcmp.ne.s32.totalorder %v700, 0
    %vm765 = vcmp.ne.s32.totalorder %v701, 0
    %vm766 = vcmp.ne.s32.totalorder %v702, 0
    %vm767 = vcmp.ne.s32.totalorder %v703, 0
    %vm768 = vcmp.ne.s32.totalorder %v704, 0
    %vm769 = vcmp.ne.s32.totalorder %v705, 0
    %vm770 = vcmp.ne.s32.totalorder %v706, 0
    %vm771 = vcmp.ne.s32.totalorder %v707, 0
    %vm772 = vcmp.ne.s32.totalorder %v708, 0
    %vm773 = vcmp.ne.s32.totalorder %v709, 0
    %vm774 = vcmp.ne.s32.totalorder %v710, 0
    %vm775 = vcmp.ne.s32.totalorder %v711, 0
    %vm776 = vcmp.ne.s32.totalorder %v712, 0
    %vm777 = vcmp.ne.s32.totalorder %v713, 0
    %vm778 = vcmp.ne.s32.totalorder %v714, 0
    %vm779 = vcmp.ne.s32.totalorder %v715, 0
    %vm780 = vcmp.ne.s32.totalorder %v716, 0
    %vm781 = vcmp.ne.s32.totalorder %v717, 0
    %vm782 = vcmp.ne.s32.totalorder %v718, 0
    %vm783 = vcmp.ne.s32.totalorder %v719, 0
    %vm784 = vcmp.ne.s32.totalorder %v720, 0
    %vm785 = vcmp.ne.s32.totalorder %v721, 0
    %vm786 = vcmp.ne.s32.totalorder %v722, 0
    %vm787 = vcmp.ne.s32.totalorder %v723, 0
    %vm788 = vcmp.ne.s32.totalorder %v724, 0
    %vm789 = vcmp.ne.s32.totalorder %v725, 0
    %vm790 = vcmp.ne.s32.totalorder %v726, 0
    %vm791 = vcmp.ne.s32.totalorder %v727, 0
    %vm792 = vcmp.ne.s32.totalorder %v728, 0
    %vm793 = vcmp.ne.s32.totalorder %v729, 0
    %vm794 = vcmp.ne.s32.totalorder %v730, 0
    %vm795 = vcmp.ne.s32.totalorder %v731, 0
    %vm796 = vcmp.ne.s32.totalorder %v732, 0
    %vm797 = vcmp.ne.s32.totalorder %v733, 0
    %vm798 = vcmp.ne.s32.totalorder %v734, 0
    %vm799 = vcmp.ne.s32.totalorder %v735, 0
    %vm800 = vcmp.ne.s32.totalorder %v736, 0
    %vm801 = vcmp.ne.s32.totalorder %v737, 0
    %vm802 = vcmp.ne.s32.totalorder %v738, 0
    %vm803 = vcmp.ne.s32.totalorder %v739, 0
    %vm804 = vcmp.ne.s32.totalorder %v740, 0
    %vm805 = vcmp.ne.s32.totalorder %v741, 0
    %vm806 = vcmp.ne.s32.totalorder %v742, 0
    %vm807 = vcmp.ne.s32.totalorder %v743, 0
    %vm808 = vcmp.ne.s32.totalorder %v744, 0
    %vm809 = vcmp.ne.s32.totalorder %v745, 0
    %vm810 = vcmp.ne.s32.totalorder %v746, 0
    %vm811 = vcmp.ne.s32.totalorder %v747, 0
    %vm812 = vcmp.ne.s32.totalorder %v748, 0
    %vm813 = vcmp.ne.s32.totalorder %v749, 0
    %vm814 = vcmp.ne.s32.totalorder %v750, 0
    %vm815 = vcmp.ne.s32.totalorder %v751, 0
    %vm816 = vcmp.ne.s32.totalorder %v752, 0
    %vm817 = vcmp.ne.s32.totalorder %v753, 0
    %vm818 = vcmp.ne.s32.totalorder %v754, 0
    %vm819 = vcmp.ne.s32.totalorder %v755, 0
    %vm820 = vcmp.ne.s32.totalorder %v756, 0
    %vm821 = vcmp.ne.s32.totalorder %v757, 0
    %v822 = vsel %vm758, %v286, -1e+30
    %v823 = vsel %vm759, %v375, -1e+30
    %v824 = vsel %vm760, %v288, -1e+30
    %v825 = vsel %vm761, %v377, -1e+30
    %v826 = vsel %vm762, %v291, -1e+30
    %v827 = vsel %vm763, %v380, -1e+30
    %v828 = vsel %vm764, %v293, -1e+30
    %v829 = vsel %vm765, %v382, -1e+30
    %v830 = vsel %vm766, %v296, -1e+30
    %v831 = vsel %vm767, %v385, -1e+30
    %v832 = vsel %vm768, %v298, -1e+30
    %v833 = vsel %vm769, %v387, -1e+30
    %v834 = vsel %vm770, %v301, -1e+30
    %v835 = vsel %vm771, %v390, -1e+30
    %v836 = vsel %vm772, %v303, -1e+30
    %v837 = vsel %vm773, %v392, -1e+30
    %v838 = vsel %vm774, %v306, -1e+30
    %v839 = vsel %vm775, %v395, -1e+30
    %v840 = vsel %vm776, %v308, -1e+30
    %v841 = vsel %vm777, %v397, -1e+30
    %v842 = vsel %vm778, %v311, -1e+30
    %v843 = vsel %vm779, %v400, -1e+30
    %v844 = vsel %vm780, %v313, -1e+30
    %v845 = vsel %vm781, %v402, -1e+30
    %v846 = vsel %vm782, %v316, -1e+30
    %v847 = vsel %vm783, %v405, -1e+30
    %v848 = vsel %vm784, %v318, -1e+30
    %v849 = vsel %vm785, %v407, -1e+30
    %v850 = vsel %vm786, %v321, -1e+30
    %v851 = vsel %vm787, %v410, -1e+30
    %v852 = vsel %vm788, %v323, -1e+30
    %v853 = vsel %vm789, %v412, -1e+30
    %v854 = vsel %vm790, %v326, -1e+30
    %v855 = vsel %vm791, %v415, -1e+30
    %v856 = vsel %vm792, %v328, -1e+30
    %v857 = vsel %vm793, %v417, -1e+30
    %v858 = vsel %vm794, %v331, -1e+30
    %v859 = vsel %vm795, %v420, -1e+30
    %v860 = vsel %vm796, %v333, -1e+30
    %v861 = vsel %vm797, %v422, -1e+30
    %v862 = vsel %vm798, %v336, -1e+30
    %v863 = vsel %vm799, %v425, -1e+30
    %v864 = vsel %vm800, %v338, -1e+30
    %v865 = vsel %vm801, %v427, -1e+30
    %v866 = vsel %vm802, %v341, -1e+30
    %v867 = vsel %vm803, %v430, -1e+30
    %v868 = vsel %vm804, %v343, -1e+30
    %v869 = vsel %vm805, %v432, -1e+30
    %v870 = vsel %vm806, %v346, -1e+30
    %v871 = vsel %vm807, %v435, -1e+30
    %v872 = vsel %vm808, %v348, -1e+30
    %v873 = vsel %vm809, %v437, -1e+30
    %v874 = vsel %vm810, %v351, -1e+30
    %v875 = vsel %vm811, %v440, -1e+30
    %v876 = vsel %vm812, %v353, -1e+30
    %v877 = vsel %vm813, %v442, -1e+30
    %v878 = vsel %vm814, %v356, -1e+30
    %v879 = vsel %vm815, %v445, -1e+30
    %v880 = vsel %vm816, %v358, -1e+30
    %v881 = vsel %vm817, %v447, -1e+30
    %v882 = vsel %vm818, %v361, -1e+30
    %v883 = vsel %vm819, %v450, -1e+30
    %v884 = vsel %vm820, %v363, -1e+30
    %v885 = vsel %vm821, %v452, -1e+30
    %v886 = vmax.f32 %v822, %v823
    %887 = vmax.xlane.f32.xlu0 %v886
    %v888 = vpop.xlane.xlu0 %887
    %v889 = vmax.f32 %v824, %v825
    %890 = vmax.xlane.f32.xlu0 %v889
    %v891 = vpop.xlane.xlu0 %890
    %v892 = vmax.f32 %v826, %v827
    %893 = vmax.xlane.f32.xlu0 %v892
    %v894 = vpop.xlane.xlu0 %893
    %v895 = vmax.f32 %v828, %v829
    %896 = vmax.xlane.f32.xlu0 %v895
    %v897 = vpop.xlane.xlu0 %896
    %v898 = vmax.f32 %v830, %v831
    %899 = vmax.xlane.f32.xlu0 %v898
    %v900 = vpop.xlane.xlu0 %899
    %v901 = vmax.f32 %v832, %v833
    %902 = vmax.xlane.f32.xlu0 %v901
    %v903 = vpop.xlane.xlu0 %902
    %v904 = vmax.f32 %v834, %v835
    %905 = vmax.xlane.f32.xlu0 %v904
    %v906 = vpop.xlane.xlu0 %905
    %v907 = vmax.f32 %v836, %v837
    %908 = vmax.xlane.f32.xlu0 %v907
    %v909 = vpop.xlane.xlu0 %908
    %v910 = vmax.f32 %v838, %v839
    %911 = vmax.xlane.f32.xlu0 %v910
    %v912 = vpop.xlane.xlu0 %911
    %v913 = vmax.f32 %v840, %v841
    %914 = vmax.xlane.f32.xlu0 %v913
    %v915 = vpop.xlane.xlu0 %914
    %v916 = vmax.f32 %v842, %v843
    %917 = vmax.xlane.f32.xlu0 %v916
    %v918 = vpop.xlane.xlu0 %917
    %v919 = vmax.f32 %v844, %v845
    %920 = vmax.xlane.f32.xlu0 %v919
    %v921 = vpop.xlane.xlu0 %920
    %v922 = vmax.f32 %v846, %v847
    %923 = vmax.xlane.f32.xlu0 %v922
    %v924 = vpop.xlane.xlu0 %923
    %v925 = vmax.f32 %v848, %v849
    %926 = vmax.xlane.f32.xlu0 %v925
    %v927 = vpop.xlane.xlu0 %926
    %v928 = vmax.f32 %v850, %v851
    %929 = vmax.xlane.f32.xlu0 %v928
    %v930 = vpop.xlane.xlu0 %929
    %v931 = vmax.f32 %v852, %v853
    %932 = vmax.xlane.f32.xlu0 %v931
    %v933 = vpop.xlane.xlu0 %932
    %v934 = vmax.f32 %v854, %v855
    %935 = vmax.xlane.f32.xlu0 %v934
    %v936 = vpop.xlane.xlu0 %935
    %v937 = vmax.f32 %v856, %v857
    %938 = vmax.xlane.f32.xlu0 %v937
    %v939 = vpop.xlane.xlu0 %938
    %v940 = vmax.f32 %v858, %v859
    %941 = vmax.xlane.f32.xlu0 %v940
    %v942 = vpop.xlane.xlu0 %941
    %v943 = vmax.f32 %v860, %v861
    %944 = vmax.xlane.f32.xlu0 %v943
    %v945 = vpop.xlane.xlu0 %944
    %v946 = vmax.f32 %v862, %v863
    %947 = vmax.xlane.f32.xlu0 %v946
    %v948 = vpop.xlane.xlu0 %947
    %v949 = vmax.f32 %v864, %v865
    %950 = vmax.xlane.f32.xlu0 %v949
    %v951 = vpop.xlane.xlu0 %950
    %v952 = vmax.f32 %v866, %v867
    %953 = vmax.xlane.f32.xlu0 %v952
    %v954 = vpop.xlane.xlu0 %953
    %v955 = vmax.f32 %v868, %v869
    %956 = vmax.xlane.f32.xlu0 %v955
    %v957 = vpop.xlane.xlu0 %956
    %v958 = vmax.f32 %v870, %v871
    %959 = vmax.xlane.f32.xlu0 %v958
    %v960 = vpop.xlane.xlu0 %959
    %v961 = vmax.f32 %v872, %v873
    %962 = vmax.xlane.f32.xlu0 %v961
    %v963 = vpop.xlane.xlu0 %962
    %v964 = vmax.f32 %v874, %v875
    %965 = vmax.xlane.f32.xlu0 %v964
    %v966 = vpop.xlane.xlu0 %965
    %v967 = vmax.f32 %v876, %v877
    %968 = vmax.xlane.f32.xlu0 %v967
    %v969 = vpop.xlane.xlu0 %968
    %v970 = vmax.f32 %v878, %v879
    %971 = vmax.xlane.f32.xlu0 %v970
    %v972 = vpop.xlane.xlu0 %971
    %v973 = vmax.f32 %v880, %v881
    %974 = vmax.xlane.f32.xlu0 %v973
    %v975 = vpop.xlane.xlu0 %974
    %v976 = vmax.f32 %v882, %v883
    %977 = vmax.xlane.f32.xlu0 %v976
    %v978 = vpop.xlane.xlu0 %977
    %v979 = vmax.f32 %v884, %v885
    %980 = vmax.xlane.f32.xlu0 %v979
    %v981 = vpop.xlane.xlu0 %980
    %v982 = vsub.f32 %v822, %v888
    %v983 = vsub.f32 %v823, %v888
    %v984 = vsub.f32 %v824, %v891
    %v985 = vsub.f32 %v825, %v891
    %v986 = vsub.f32 %v826, %v894
    %v987 = vsub.f32 %v827, %v894
    %v988 = vsub.f32 %v828, %v897
    %v989 = vsub.f32 %v829, %v897
    %v990 = vsub.f32 %v830, %v900
    %v991 = vsub.f32 %v831, %v900
    %v992 = vsub.f32 %v832, %v903
    %v993 = vsub.f32 %v833, %v903
    %v994 = vsub.f32 %v834, %v906
    %v995 = vsub.f32 %v835, %v906
    %v996 = vsub.f32 %v836, %v909
    %v997 = vsub.f32 %v837, %v909
    %v998 = vsub.f32 %v838, %v912
    %v999 = vsub.f32 %v839, %v912
    %v1000 = vsub.f32 %v840, %v915
    %v1001 = vsub.f32 %v841, %v915
    %v1002 = vsub.f32 %v842, %v918
    %v1003 = vsub.f32 %v843, %v918
    %v1004 = vsub.f32 %v844, %v921
    %v1005 = vsub.f32 %v845, %v921
    %v1006 = vsub.f32 %v846, %v924
    %v1007 = vsub.f32 %v847, %v924
    %v1008 = vsub.f32 %v848, %v927
    %v1009 = vsub.f32 %v849, %v927
    %v1010 = vsub.f32 %v850, %v930
    %v1011 = vsub.f32 %v851, %v930
    %v1012 = vsub.f32 %v852, %v933
    %v1013 = vsub.f32 %v853, %v933
    %v1014 = vsub.f32 %v854, %v936
    %v1015 = vsub.f32 %v855, %v936
    %v1016 = vsub.f32 %v856, %v939
    %v1017 = vsub.f32 %v857, %v939
    %v1018 = vsub.f32 %v858, %v942
    %v1019 = vsub.f32 %v859, %v942
    %v1020 = vsub.f32 %v860, %v945
    %v1021 = vsub.f32 %v861, %v945
    %v1022 = vsub.f32 %v862, %v948
    %v1023 = vsub.f32 %v863, %v948
    %v1024 = vsub.f32 %v864, %v951
    %v1025 = vsub.f32 %v865, %v951
    %v1026 = vsub.f32 %v866, %v954
    %v1027 = vsub.f32 %v867, %v954
    %v1028 = vsub.f32 %v868, %v957
    %v1029 = vsub.f32 %v869, %v957
    %v1030 = vsub.f32 %v870, %v960
    %v1031 = vsub.f32 %v871, %v960
    %v1032 = vsub.f32 %v872, %v963
    %v1033 = vsub.f32 %v873, %v963
    %v1034 = vsub.f32 %v874, %v966
    %v1035 = vsub.f32 %v875, %v966
    %v1036 = vsub.f32 %v876, %v969
    %v1037 = vsub.f32 %v877, %v969
    %v1038 = vsub.f32 %v878, %v972
    %v1039 = vsub.f32 %v879, %v972
    %v1040 = vsub.f32 %v880, %v975
    %v1041 = vsub.f32 %v881, %v975
    %v1042 = vsub.f32 %v882, %v978
    %v1043 = vsub.f32 %v883, %v978
    %v1044 = vsub.f32 %v884, %v981
    %v1045 = vsub.f32 %v885, %v981
    %v1046 = vmul.f32 %v982, 1.442695
    %v1047 = vpow.pop %v1046
    %v1048 = vmul.f32 %v983, 1.442695
    %v1049 = vpow.pop %v1048
    %v1050 = vmul.f32 %v984, 1.442695
    %v1051 = vpow.pop %v1050
    %v1052 = vmul.f32 %v985, 1.442695
    %v1053 = vpow.pop %v1052
    %v1054 = vmul.f32 %v986, 1.442695
    %v1055 = vpow.pop %v1054
    %v1056 = vmul.f32 %v987, 1.442695
    %v1057 = vpow.pop %v1056
    %v1058 = vmul.f32 %v988, 1.442695
    %v1059 = vpow.pop %v1058
    %v1060 = vmul.f32 %v989, 1.442695
    %v1061 = vpow.pop %v1060
    %v1062 = vmul.f32 %v990, 1.442695
    %v1063 = vpow.pop %v1062
    %v1064 = vmul.f32 %v991, 1.442695
    %v1065 = vpow.pop %v1064
    %v1066 = vmul.f32 %v992, 1.442695
    %v1067 = vpow.pop %v1066
    %v1068 = vmul.f32 %v993, 1.442695
    %v1069 = vpow.pop %v1068
    %v1070 = vmul.f32 %v994, 1.442695
    %v1071 = vpow.pop %v1070
    %v1072 = vmul.f32 %v995, 1.442695
    %v1073 = vpow.pop %v1072
    %v1074 = vmul.f32 %v996, 1.442695
    %v1075 = vpow.pop %v1074
    %v1076 = vmul.f32 %v997, 1.442695
    %v1077 = vpow.pop %v1076
    %v1078 = vmul.f32 %v998, 1.442695
    %v1079 = vpow.pop %v1078
    %v1080 = vmul.f32 %v999, 1.442695
    %v1081 = vpow.pop %v1080
    %v1082 = vmul.f32 %v1000, 1.442695
    %v1083 = vpow.pop %v1082
    %v1084 = vmul.f32 %v1001, 1.442695
    %v1085 = vpow.pop %v1084
    %v1086 = vmul.f32 %v1002, 1.442695
    %v1087 = vpow.pop %v1086
    %v1088 = vmul.f32 %v1003, 1.442695
    %v1089 = vpow.pop %v1088
    %v1090 = vmul.f32 %v1004, 1.442695
    %v1091 = vpow.pop %v1090
    %v1092 = vmul.f32 %v1005, 1.442695
    %v1093 = vpow.pop %v1092
    %v1094 = vmul.f32 %v1006, 1.442695
    %v1095 = vpow.pop %v1094
    %v1096 = vmul.f32 %v1007, 1.442695
    %v1097 = vpow.pop %v1096
    %v1098 = vmul.f32 %v1008, 1.442695
    %v1099 = vpow.pop %v1098
    %v1100 = vmul.f32 %v1009, 1.442695
    %v1101 = vpow.pop %v1100
    %v1102 = vmul.f32 %v1010, 1.442695
    %v1103 = vpow.pop %v1102
    %v1104 = vmul.f32 %v1011, 1.442695
    %v1105 = vpow.pop %v1104
    %v1106 = vmul.f32 %v1012, 1.442695
    %v1107 = vpow.pop %v1106
    %v1108 = vmul.f32 %v1013, 1.442695
    %v1109 = vpow.pop %v1108
    %v1110 = vmul.f32 %v1014, 1.442695
    %v1111 = vpow.pop %v1110
    %v1112 = vmul.f32 %v1015, 1.442695
    %v1113 = vpow.pop %v1112
    %v1114 = vmul.f32 %v1016, 1.442695
    %v1115 = vpow.pop %v1114
    %v1116 = vmul.f32 %v1017, 1.442695
    %v1117 = vpow.pop %v1116
    %v1118 = vmul.f32 %v1018, 1.442695
    %v1119 = vpow.pop %v1118
    %v1120 = vmul.f32 %v1019, 1.442695
    %v1121 = vpow.pop %v1120
    %v1122 = vmul.f32 %v1020, 1.442695
    %v1123 = vpow.pop %v1122
    %v1124 = vmul.f32 %v1021, 1.442695
    %v1125 = vpow.pop %v1124
    %v1126 = vmul.f32 %v1022, 1.442695
    %v1127 = vpow.pop %v1126
    %v1128 = vmul.f32 %v1023, 1.442695
    %v1129 = vpow.pop %v1128
    %v1130 = vmul.f32 %v1024, 1.442695
    %v1131 = vpow.pop %v1130
    %v1132 = vmul.f32 %v1025, 1.442695
    %v1133 = vpow.pop %v1132
    %v1134 = vmul.f32 %v1026, 1.442695
    %v1135 = vpow.pop %v1134
    %v1136 = vmul.f32 %v1027, 1.442695
    %v1137 = vpow.pop %v1136
    %v1138 = vmul.f32 %v1028, 1.442695
    %v1139 = vpow.pop %v1138
    %v1140 = vmul.f32 %v1029, 1.442695
    %v1141 = vpow.pop %v1140
    %v1142 = vmul.f32 %v1030, 1.442695
    %v1143 = vpow.pop %v1142
    %v1144 = vmul.f32 %v1031, 1.442695
    %v1145 = vpow.pop %v1144
    %v1146 = vmul.f32 %v1032, 1.442695
    %v1147 = vpow.pop %v1146
    %v1148 = vmul.f32 %v1033, 1.442695
    %v1149 = vpow.pop %v1148
    %v1150 = vmul.f32 %v1034, 1.442695
    %v1151 = vpow.pop %v1150
    %v1152 = vmul.f32 %v1035, 1.442695
    %v1153 = vpow.pop %v1152
    %v1154 = vmul.f32 %v1036, 1.442695
    %v1155 = vpow.pop %v1154
    %v1156 = vmul.f32 %v1037, 1.442695
    %v1157 = vpow.pop %v1156
    %v1158 = vmul.f32 %v1038, 1.442695
    %v1159 = vpow.pop %v1158
    %v1160 = vmul.f32 %v1039, 1.442695
    %v1161 = vpow.pop %v1160
    %v1162 = vmul.f32 %v1040, 1.442695
    %v1163 = vpow.pop %v1162
    %v1164 = vmul.f32 %v1041, 1.442695
    %v1165 = vpow.pop %v1164
    %v1166 = vmul.f32 %v1042, 1.442695
    %v1167 = vpow.pop %v1166
    %v1168 = vmul.f32 %v1043, 1.442695
    %v1169 = vpow.pop %v1168
    %v1170 = vmul.f32 %v1044, 1.442695
    %v1171 = vpow.pop %v1170
    %v1172 = vmul.f32 %v1045, 1.442695
    %v1173 = vpow.pop %v1172
    %v1174 = vadd.f32 %v1047, %v1049
    %1175 = vadd.xlane.f32.xlu0 %v1174
    %v1176 = vpop.xlane.xlu0 %1175
    %v1177 = vadd.f32 %v1051, %v1053
    %1178 = vadd.xlane.f32.xlu0 %v1177
    %v1179 = vpop.xlane.xlu0 %1178
    %v1180 = vadd.f32 %v1055, %v1057
    %1181 = vadd.xlane.f32.xlu0 %v1180
    %v1182 = vpop.xlane.xlu0 %1181
    %v1183 = vadd.f32 %v1059, %v1061
    %1184 = vadd.xlane.f32.xlu0 %v1183
    %v1185 = vpop.xlane.xlu0 %1184
    %v1186 = vadd.f32 %v1063, %v1065
    %1187 = vadd.xlane.f32.xlu0 %v1186
    %v1188 = vpop.xlane.xlu0 %1187
    %v1189 = vadd.f32 %v1067, %v1069
    %1190 = vadd.xlane.f32.xlu0 %v1189
    %v1191 = vpop.xlane.xlu0 %1190
    %v1192 = vadd.f32 %v1071, %v1073
    %1193 = vadd.xlane.f32.xlu0 %v1192
    %v1194 = vpop.xlane.xlu0 %1193
    %v1195 = vadd.f32 %v1075, %v1077
    %1196 = vadd.xlane.f32.xlu0 %v1195
    %v1197 = vpop.xlane.xlu0 %1196
    %v1198 = vadd.f32 %v1079, %v1081
    %1199 = vadd.xlane.f32.xlu0 %v1198
    %v1200 = vpop.xlane.xlu0 %1199
    %v1201 = vadd.f32 %v1083, %v1085
    %1202 = vadd.xlane.f32.xlu0 %v1201
    %v1203 = vpop.xlane.xlu0 %1202
    %v1204 = vadd.f32 %v1087, %v1089
    %1205 = vadd.xlane.f32.xlu0 %v1204
    %v1206 = vpop.xlane.xlu0 %1205
    %v1207 = vadd.f32 %v1091, %v1093
    %1208 = vadd.xlane.f32.xlu0 %v1207
    %v1209 = vpop.xlane.xlu0 %1208
    %v1210 = vadd.f32 %v1095, %v1097
    %1211 = vadd.xlane.f32.xlu0 %v1210
    %v1212 = vpop.xlane.xlu0 %1211
    %v1213 = vadd.f32 %v1099, %v1101
    %1214 = vadd.xlane.f32.xlu0 %v1213
    %v1215 = vpop.xlane.xlu0 %1214
    %v1216 = vadd.f32 %v1103, %v1105
    %1217 = vadd.xlane.f32.xlu0 %v1216
    %v1218 = vpop.xlane.xlu0 %1217
    %v1219 = vadd.f32 %v1107, %v1109
    %1220 = vadd.xlane.f32.xlu0 %v1219
    %v1221 = vpop.xlane.xlu0 %1220
    %v1222 = vadd.f32 %v1111, %v1113
    %1223 = vadd.xlane.f32.xlu0 %v1222
    %v1224 = vpop.xlane.xlu0 %1223
    %v1225 = vadd.f32 %v1115, %v1117
    %1226 = vadd.xlane.f32.xlu0 %v1225
    %v1227 = vpop.xlane.xlu0 %1226
    %v1228 = vadd.f32 %v1119, %v1121
    %1229 = vadd.xlane.f32.xlu0 %v1228
    %v1230 = vpop.xlane.xlu0 %1229
    %v1231 = vadd.f32 %v1123, %v1125
    %1232 = vadd.xlane.f32.xlu0 %v1231
    %v1233 = vpop.xlane.xlu0 %1232
    %v1234 = vadd.f32 %v1127, %v1129
    %1235 = vadd.xlane.f32.xlu0 %v1234
    %v1236 = vpop.xlane.xlu0 %1235
    %v1237 = vadd.f32 %v1131, %v1133
    %1238 = vadd.xlane.f32.xlu0 %v1237
    %v1239 = vpop.xlane.xlu0 %1238
    %v1240 = vadd.f32 %v1135, %v1137
    %1241 = vadd.xlane.f32.xlu0 %v1240
    %v1242 = vpop.xlane.xlu0 %1241
    %v1243 = vadd.f32 %v1139, %v1141
    %1244 = vadd.xlane.f32.xlu0 %v1243
    %v1245 = vpop.xlane.xlu0 %1244
    %v1246 = vadd.f32 %v1143, %v1145
    %1247 = vadd.xlane.f32.xlu0 %v1246
    %v1248 = vpop.xlane.xlu0 %1247
    %v1249 = vadd.f32 %v1147, %v1149
    %1250 = vadd.xlane.f32.xlu0 %v1249
    %v1251 = vpop.xlane.xlu0 %1250
    %v1252 = vadd.f32 %v1151, %v1153
    %1253 = vadd.xlane.f32.xlu0 %v1252
    %v1254 = vpop.xlane.xlu0 %1253
    %v1255 = vadd.f32 %v1155, %v1157
    %1256 = vadd.xlane.f32.xlu0 %v1255
    %v1257 = vpop.xlane.xlu0 %1256
    %v1258 = vadd.f32 %v1159, %v1161
    %1259 = vadd.xlane.f32.xlu0 %v1258
    %v1260 = vpop.xlane.xlu0 %1259
    %v1261 = vadd.f32 %v1163, %v1165
    %1262 = vadd.xlane.f32.xlu0 %v1261
    %v1263 = vpop.xlane.xlu0 %1262
    %v1264 = vadd.f32 %v1167, %v1169
    %1265 = vadd.xlane.f32.xlu0 %v1264
    %v1266 = vpop.xlane.xlu0 %1265
    %v1267 = vadd.f32 %v1171, %v1173
    %1268 = vadd.xlane.f32.xlu0 %v1267
    %v1269 = vpop.xlane.xlu0 %1268
    %v1270 = vpack.c.bf16 %v1051, %v1047
    %v1271 = vpack.c.bf16 %v1053, %v1049
    %v1272 = vpack.c.bf16 %v1059, %v1055
    %v1273 = vpack.c.bf16 %v1061, %v1057
    %v1274 = vpack.c.bf16 %v1067, %v1063
    %v1275 = vpack.c.bf16 %v1069, %v1065
    %v1276 = vpack.c.bf16 %v1075, %v1071
    %v1277 = vpack.c.bf16 %v1077, %v1073
    %v1278 = vpack.c.bf16 %v1083, %v1079
    %v1279 = vpack.c.bf16 %v1085, %v1081
    %v1280 = vpack.c.bf16 %v1091, %v1087
    %v1281 = vpack.c.bf16 %v1093, %v1089
    %v1282 = vpack.c.bf16 %v1099, %v1095
    %v1283 = vpack.c.bf16 %v1101, %v1097
    %v1284 = vpack.c.bf16 %v1107, %v1103
    %v1285 = vpack.c.bf16 %v1109, %v1105
    %v1286 = vpack.c.bf16 %v1115, %v1111
    %v1287 = vpack.c.bf16 %v1117, %v1113
    %v1288 = vpack.c.bf16 %v1123, %v1119
    %v1289 = vpack.c.bf16 %v1125, %v1121
    %v1290 = vpack.c.bf16 %v1131, %v1127
    %v1291 = vpack.c.bf16 %v1133, %v1129
    %v1292 = vpack.c.bf16 %v1139, %v1135
    %v1293 = vpack.c.bf16 %v1141, %v1137
    %v1294 = vpack.c.bf16 %v1147, %v1143
    %v1295 = vpack.c.bf16 %v1149, %v1145
    %v1296 = vpack.c.bf16 %v1155, %v1151
    %v1297 = vpack.c.bf16 %v1157, %v1153
    %v1298 = vpack.c.bf16 %v1163, %v1159
    %v1299 = vpack.c.bf16 %v1165, %v1161
    %v1300 = vpack.c.bf16 %v1171, %v1167
    %v1301 = vpack.c.bf16 %v1173, %v1169
    %v1302 = vld [vmem:[%s2] sm:$0xf]
    %v1303 = vld [vmem:[%s2 + $0x4] sm:$0xf]
    %v1304 = vld [vmem:[%s2 + $0x8] sm:$0xf]
    %v1305 = vld [vmem:[%s2 + $0xc] sm:$0xf]
    %v1306 = vld [vmem:[%s2 + $0x10] sm:$0xf]
    %v1307 = vld [vmem:[%s2 + $0x14] sm:$0xf]
    %v1308 = vld [vmem:[%s2 + $0x18] sm:$0xf]
    %v1309 = vld [vmem:[%s2 + $0x1c] sm:$0xf]
    %v1310 = vld [vmem:[%s2 + $0x20] sm:$0xf]
    %v1311 = vld [vmem:[%s2 + $0x24] sm:$0xf]
    %v1312 = vld [vmem:[%s2 + $0x28] sm:$0xf]
    %v1313 = vld [vmem:[%s2 + $0x2c] sm:$0xf]
    %v1314 = vld [vmem:[%s2 + $0x30] sm:$0xf]
    %v1315 = vld [vmem:[%s2 + $0x34] sm:$0xf]
    %v1316 = vld [vmem:[%s2 + $0x38] sm:$0xf]
    %v1317 = vld [vmem:[%s2 + $0x3c] sm:$0xf]
    %v1318 = vld [vmem:[%s2 + $0x40] sm:$0xf]
    %v1319 = vld [vmem:[%s2 + $0x44] sm:$0xf]
    %v1320 = vld [vmem:[%s2 + $0x48] sm:$0xf]
    %v1321 = vld [vmem:[%s2 + $0x4c] sm:$0xf]
    %v1322 = vld [vmem:[%s2 + $0x50] sm:$0xf]
    %v1323 = vld [vmem:[%s2 + $0x54] sm:$0xf]
    %v1324 = vld [vmem:[%s2 + $0x58] sm:$0xf]
    %v1325 = vld [vmem:[%s2 + $0x5c] sm:$0xf]
    %v1326 = vld [vmem:[%s2 + $0x60] sm:$0xf]
    %v1327 = vld [vmem:[%s2 + $0x64] sm:$0xf]
    %v1328 = vld [vmem:[%s2 + $0x68] sm:$0xf]
    %v1329 = vld [vmem:[%s2 + $0x6c] sm:$0xf]
    %v1330 = vld [vmem:[%s2 + $0x70] sm:$0xf]
    %v1331 = vld [vmem:[%s2 + $0x74] sm:$0xf]
    %v1332 = vld [vmem:[%s2 + $0x78] sm:$0xf]
    %v1333 = vld [vmem:[%s2 + $0x7c] sm:$0xf]
    %v1366 = vunpack.c.l.b16 %v1302
    %v1367 = vunpack.c.l.b16 %v1303
    %v1368 = vunpack.c.l.b16 %v1304
    %v1369 = vunpack.c.l.b16 %v1305
    %v1370 = vunpack.c.l.b16 %v1306
    %v1371 = vunpack.c.l.b16 %v1307
    %v1372 = vunpack.c.l.b16 %v1308
    %v1373 = vunpack.c.l.b16 %v1309
    %v1374 = vunpack.c.l.b16 %v1310
    %v1375 = vunpack.c.l.b16 %v1311
    %v1376 = vunpack.c.l.b16 %v1312
    %v1377 = vunpack.c.l.b16 %v1313
    %v1378 = vunpack.c.l.b16 %v1314
    %v1379 = vunpack.c.l.b16 %v1315
    %v1380 = vunpack.c.l.b16 %v1316
    %v1381 = vunpack.c.l.b16 %v1317
    %v1382 = vunpack.c.l.b16 %v1318
    %v1383 = vunpack.c.l.b16 %v1319
    %v1384 = vunpack.c.l.b16 %v1320
    %v1385 = vunpack.c.l.b16 %v1321
    %v1386 = vunpack.c.l.b16 %v1322
    %v1387 = vunpack.c.l.b16 %v1323
    %v1388 = vunpack.c.l.b16 %v1324
    %v1389 = vunpack.c.l.b16 %v1325
    %v1390 = vunpack.c.l.b16 %v1326
    %v1391 = vunpack.c.l.b16 %v1327
    %v1392 = vunpack.c.l.b16 %v1328
    %v1393 = vunpack.c.l.b16 %v1329
    %v1394 = vunpack.c.l.b16 %v1330
    %v1395 = vunpack.c.l.b16 %v1331
    %v1396 = vunpack.c.l.b16 %v1332
    %v1397 = vunpack.c.l.b16 %v1333
    %v1398 = vpack.c.b16 %v1367, %v1366
    %v1399 = vpack.c.b16 %v1369, %v1368
    %v1400 = vpack.c.b16 %v1371, %v1370
    %v1401 = vpack.c.b16 %v1373, %v1372
    %v1402 = vpack.c.b16 %v1375, %v1374
    %v1403 = vpack.c.b16 %v1377, %v1376
    %v1404 = vpack.c.b16 %v1379, %v1378
    %v1405 = vpack.c.b16 %v1381, %v1380
    %v1406 = vpack.c.b16 %v1383, %v1382
    %v1407 = vpack.c.b16 %v1385, %v1384
    %v1408 = vpack.c.b16 %v1387, %v1386
    %v1409 = vpack.c.b16 %v1389, %v1388
    %v1410 = vpack.c.b16 %v1391, %v1390
    %v1411 = vpack.c.b16 %v1393, %v1392
    %v1412 = vpack.c.b16 %v1395, %v1394
    %v1413 = vpack.c.b16 %v1397, %v1396
    %1430 = vmatpush.bf16.msra.mxu0 %v1405
    %1431 = vmatpush.bf16.msra.mxu0 %v1404
    %1432 = vmatpush.bf16.msra.mxu0 %v1403
    %1433 = vmatpush.bf16.msra.mxu0 %v1402
    %1434 = vmatpush.bf16.msra.mxu0 %v1401
    %1435 = vmatpush.bf16.msra.mxu0 %v1400
    %1436 = vmatpush.bf16.msra.mxu0 %v1399
    %1437 = vmatpush.bf16.msra.mxu0 %v1398
    %1438 = vmatmul.bf16.gmra.mxu0 %v1270
    %v1439 = vpop.f32.mrf.mxu0
    %v1440 = vadd.f32 0.0, %v1439
    %v1441 = vpop.f32.mrf.mxu0
    %v1442 = vadd.f32 0.0, %v1441
    %1443 = vmatmul.bf16.gmra.mxu0 %v1272
    %v1444 = vpop.f32.mrf.mxu0
    %v1445 = vadd.f32 0.0, %v1444
    %v1446 = vpop.f32.mrf.mxu0
    %v1447 = vadd.f32 0.0, %v1446
    %1448 = vmatmul.bf16.gmra.mxu0 %v1274
    %v1449 = vpop.f32.mrf.mxu0
    %v1450 = vadd.f32 0.0, %v1449
    %v1451 = vpop.f32.mrf.mxu0
    %v1452 = vadd.f32 0.0, %v1451
    %1453 = vmatmul.bf16.gmra.mxu0 %v1276
    %v1454 = vpop.f32.mrf.mxu0
    %v1455 = vadd.f32 0.0, %v1454
    %v1456 = vpop.f32.mrf.mxu0
    %v1457 = vadd.f32 0.0, %v1456
    %1458 = vmatmul.bf16.gmra.mxu0 %v1278
    %v1459 = vpop.f32.mrf.mxu0
    %v1460 = vadd.f32 0.0, %v1459
    %v1461 = vpop.f32.mrf.mxu0
    %v1462 = vadd.f32 0.0, %v1461
    %1463 = vmatmul.bf16.gmra.mxu0 %v1280
    %v1464 = vpop.f32.mrf.mxu0
    %v1465 = vadd.f32 0.0, %v1464
    %v1466 = vpop.f32.mrf.mxu0
    %v1467 = vadd.f32 0.0, %v1466
    %1468 = vmatmul.bf16.gmra.mxu0 %v1282
    %v1469 = vpop.f32.mrf.mxu0
    %v1470 = vadd.f32 0.0, %v1469
    %v1471 = vpop.f32.mrf.mxu0
    %v1472 = vadd.f32 0.0, %v1471
    %1473 = vmatmul.bf16.gmra.mxu0 %v1284
    %v1474 = vpop.f32.mrf.mxu0
    %v1475 = vadd.f32 0.0, %v1474
    %v1476 = vpop.f32.mrf.mxu0
    %v1477 = vadd.f32 0.0, %v1476
    %1478 = vmatmul.bf16.gmra.mxu0 %v1286
    %v1479 = vpop.f32.mrf.mxu0
    %v1480 = vadd.f32 0.0, %v1479
    %v1481 = vpop.f32.mrf.mxu0
    %v1482 = vadd.f32 0.0, %v1481
    %1483 = vmatmul.bf16.gmra.mxu0 %v1288
    %v1484 = vpop.f32.mrf.mxu0
    %v1485 = vadd.f32 0.0, %v1484
    %v1486 = vpop.f32.mrf.mxu0
    %v1487 = vadd.f32 0.0, %v1486
    %1488 = vmatmul.bf16.gmra.mxu0 %v1290
    %v1489 = vpop.f32.mrf.mxu0
    %v1490 = vadd.f32 0.0, %v1489
    %v1491 = vpop.f32.mrf.mxu0
    %v1492 = vadd.f32 0.0, %v1491
    %1493 = vmatmul.bf16.gmra.mxu0 %v1292
    %v1494 = vpop.f32.mrf.mxu0
    %v1495 = vadd.f32 0.0, %v1494
    %v1496 = vpop.f32.mrf.mxu0
    %v1497 = vadd.f32 0.0, %v1496
    %1498 = vmatmul.bf16.gmra.mxu0 %v1294
    %v1499 = vpop.f32.mrf.mxu0
    %v1500 = vadd.f32 0.0, %v1499
    %v1501 = vpop.f32.mrf.mxu0
    %v1502 = vadd.f32 0.0, %v1501
    %1503 = vmatmul.bf16.gmra.mxu0 %v1296
    %v1504 = vpop.f32.mrf.mxu0
    %v1505 = vadd.f32 0.0, %v1504
    %v1506 = vpop.f32.mrf.mxu0
    %v1507 = vadd.f32 0.0, %v1506
    %1508 = vmatmul.bf16.gmra.mxu0 %v1298
    %v1509 = vpop.f32.mrf.mxu0
    %v1510 = vadd.f32 0.0, %v1509
    %v1511 = vpop.f32.mrf.mxu0
    %v1512 = vadd.f32 0.0, %v1511
    %1513 = vmatmul.bf16.gmra.mxu0 %v1300
    %v1514 = vpop.f32.mrf.mxu0
    %v1515 = vadd.f32 0.0, %v1514
    %v1516 = vpop.f32.mrf.mxu0
    %v1517 = vadd.f32 0.0, %v1516
    %1518 = vdwg.mxu0
    %1519 = vmatpush.bf16.msra.mxu0 %v1413
    %1520 = vmatpush.bf16.msra.mxu0 %v1412
    %1521 = vmatpush.bf16.msra.mxu0 %v1411
    %1522 = vmatpush.bf16.msra.mxu0 %v1410
    %1523 = vmatpush.bf16.msra.mxu0 %v1409
    %1524 = vmatpush.bf16.msra.mxu0 %v1408
    %1525 = vmatpush.bf16.msra.mxu0 %v1407
    %1526 = vmatpush.bf16.msra.mxu0 %v1406
    %1527 = vmatmul.bf16.gmra.mxu0 %v1271
    %v1528 = vpop.f32.mrf.mxu0
    %v1529 = vadd.f32 %v1440, %v1528
    %v1530 = vpop.f32.mrf.mxu0
    %v1531 = vadd.f32 %v1442, %v1530
    %1532 = vmatmul.bf16.gmra.mxu0 %v1273
    %v1533 = vpop.f32.mrf.mxu0
    %v1534 = vadd.f32 %v1445, %v1533
    %v1535 = vpop.f32.mrf.mxu0
    %v1536 = vadd.f32 %v1447, %v1535
    %1537 = vmatmul.bf16.gmra.mxu0 %v1275
    %v1538 = vpop.f32.mrf.mxu0
    %v1539 = vadd.f32 %v1450, %v1538
    %v1540 = vpop.f32.mrf.mxu0
    %v1541 = vadd.f32 %v1452, %v1540
    %1542 = vmatmul.bf16.gmra.mxu0 %v1277
    %v1543 = vpop.f32.mrf.mxu0
    %v1544 = vadd.f32 %v1455, %v1543
    %v1545 = vpop.f32.mrf.mxu0
    %v1546 = vadd.f32 %v1457, %v1545
    %1547 = vmatmul.bf16.gmra.mxu0 %v1279
    %v1548 = vpop.f32.mrf.mxu0
    %v1549 = vadd.f32 %v1460, %v1548
    %v1550 = vpop.f32.mrf.mxu0
    %v1551 = vadd.f32 %v1462, %v1550
    %1552 = vmatmul.bf16.gmra.mxu0 %v1281
    %v1553 = vpop.f32.mrf.mxu0
    %v1554 = vadd.f32 %v1465, %v1553
    %v1555 = vpop.f32.mrf.mxu0
    %v1556 = vadd.f32 %v1467, %v1555
    %1557 = vmatmul.bf16.gmra.mxu0 %v1283
    %v1558 = vpop.f32.mrf.mxu0
    %v1559 = vadd.f32 %v1470, %v1558
    %v1560 = vpop.f32.mrf.mxu0
    %v1561 = vadd.f32 %v1472, %v1560
    %1562 = vmatmul.bf16.gmra.mxu0 %v1285
    %v1563 = vpop.f32.mrf.mxu0
    %v1564 = vadd.f32 %v1475, %v1563
    %v1565 = vpop.f32.mrf.mxu0
    %v1566 = vadd.f32 %v1477, %v1565
    %1567 = vmatmul.bf16.gmra.mxu0 %v1287
    %v1568 = vpop.f32.mrf.mxu0
    %v1569 = vadd.f32 %v1480, %v1568
    %v1570 = vpop.f32.mrf.mxu0
    %v1571 = vadd.f32 %v1482, %v1570
    %1572 = vmatmul.bf16.gmra.mxu0 %v1289
    %v1573 = vpop.f32.mrf.mxu0
    %v1574 = vadd.f32 %v1485, %v1573
    %v1575 = vpop.f32.mrf.mxu0
    %v1576 = vadd.f32 %v1487, %v1575
    %1577 = vmatmul.bf16.gmra.mxu0 %v1291
    %v1578 = vpop.f32.mrf.mxu0
    %v1579 = vadd.f32 %v1490, %v1578
    %v1580 = vpop.f32.mrf.mxu0
    %v1581 = vadd.f32 %v1492, %v1580
    %1582 = vmatmul.bf16.gmra.mxu0 %v1293
    %v1583 = vpop.f32.mrf.mxu0
    %v1584 = vadd.f32 %v1495, %v1583
    %v1585 = vpop.f32.mrf.mxu0
    %v1586 = vadd.f32 %v1497, %v1585
    %1587 = vmatmul.bf16.gmra.mxu0 %v1295
    %v1588 = vpop.f32.mrf.mxu0
    %v1589 = vadd.f32 %v1500, %v1588
    %v1590 = vpop.f32.mrf.mxu0
    %v1591 = vadd.f32 %v1502, %v1590
    %1592 = vmatmul.bf16.gmra.mxu0 %v1297
    %v1593 = vpop.f32.mrf.mxu0
    %v1594 = vadd.f32 %v1505, %v1593
    %v1595 = vpop.f32.mrf.mxu0
    %v1596 = vadd.f32 %v1507, %v1595
    %1597 = vmatmul.bf16.gmra.mxu0 %v1299
    %v1598 = vpop.f32.mrf.mxu0
    %v1599 = vadd.f32 %v1510, %v1598
    %v1600 = vpop.f32.mrf.mxu0
    %v1601 = vadd.f32 %v1512, %v1600
    %1602 = vmatmul.bf16.gmra.mxu0 %v1301
    %v1603 = vpop.f32.mrf.mxu0
    %v1604 = vadd.f32 %v1515, %v1603
    %v1605 = vpop.f32.mrf.mxu0
    %v1606 = vadd.f32 %v1517, %v1605
    %1607 = vdwg.mxu0
    %v1608 = vrcp.pop %v1176
    %v1609 = vmul.f32 %v1176, %v1608
    %v1610 = vsub.f32 1.0, %v1609
    %v1611 = vmul.f32 %v1608, %v1610
    %v1612 = vadd.f32 %v1608, %v1611
    %vm1613 = vweird.f32 %v1176
    %vm1614 = vweird.f32 %v1608
    %vm1615 = vmor %vm1613, %vm1614
    %v1616 = vsel %vm1615, %v1608, %v1612
    %v1617 = vand.u32 2147483647, %v1176
    %vm1618 = vcmp.eq.f32.partialorder %v1617, 8.507059e+37
    %v1619 = vand.u32 %v1176, 2147483648
    %v1620 = vor.u32 1.1754944e-38, %v1619
    %v1621 = vsel %vm1618, %v1620, %v1616
    %v1622 = vmul.f32 %v1529, %v1621
    %v1623 = vrcp.pop %v1179
    %v1624 = vmul.f32 %v1179, %v1623
    %v1625 = vsub.f32 1.0, %v1624
    %v1626 = vmul.f32 %v1623, %v1625
    %v1627 = vadd.f32 %v1623, %v1626
    %vm1628 = vweird.f32 %v1179
    %vm1629 = vweird.f32 %v1623
    %vm1630 = vmor %vm1628, %vm1629
    %v1631 = vsel %vm1630, %v1623, %v1627
    %v1632 = vand.u32 2147483647, %v1179
    %vm1633 = vcmp.eq.f32.partialorder %v1632, 8.507059e+37
    %v1634 = vand.u32 %v1179, 2147483648
    %v1635 = vor.u32 1.1754944e-38, %v1634
    %v1636 = vsel %vm1633, %v1635, %v1631
    %v1637 = vmul.f32 %v1531, %v1636
    %v1638 = vrcp.pop %v1182
    %v1639 = vmul.f32 %v1182, %v1638
    %v1640 = vsub.f32 1.0, %v1639
    %v1641 = vmul.f32 %v1638, %v1640
    %v1642 = vadd.f32 %v1638, %v1641
    %vm1643 = vweird.f32 %v1182
    %vm1644 = vweird.f32 %v1638
    %vm1645 = vmor %vm1643, %vm1644
    %v1646 = vsel %vm1645, %v1638, %v1642
    %v1647 = vand.u32 2147483647, %v1182
    %vm1648 = vcmp.eq.f32.partialorder %v1647, 8.507059e+37
    %v1649 = vand.u32 %v1182, 2147483648
    %v1650 = vor.u32 1.1754944e-38, %v1649
    %v1651 = vsel %vm1648, %v1650, %v1646
    %v1652 = vmul.f32 %v1534, %v1651
    %v1653 = vrcp.pop %v1185
    %v1654 = vmul.f32 %v1185, %v1653
    %v1655 = vsub.f32 1.0, %v1654
    %v1656 = vmul.f32 %v1653, %v1655
    %v1657 = vadd.f32 %v1653, %v1656
    %vm1658 = vweird.f32 %v1185
    %vm1659 = vweird.f32 %v1653
    %vm1660 = vmor %vm1658, %vm1659
    %v1661 = vsel %vm1660, %v1653, %v1657
    %v1662 = vand.u32 2147483647, %v1185
    %vm1663 = vcmp.eq.f32.partialorder %v1662, 8.507059e+37
    %v1664 = vand.u32 %v1185, 2147483648
    %v1665 = vor.u32 1.1754944e-38, %v1664
    %v1666 = vsel %vm1663, %v1665, %v1661
    %v1667 = vmul.f32 %v1536, %v1666
    %v1668 = vrcp.pop %v1188
    %v1669 = vmul.f32 %v1188, %v1668
    %v1670 = vsub.f32 1.0, %v1669
    %v1671 = vmul.f32 %v1668, %v1670
    %v1672 = vadd.f32 %v1668, %v1671
    %vm1673 = vweird.f32 %v1188
    %vm1674 = vweird.f32 %v1668
    %vm1675 = vmor %vm1673, %vm1674
    %v1676 = vsel %vm1675, %v1668, %v1672
    %v1677 = vand.u32 2147483647, %v1188
    %vm1678 = vcmp.eq.f32.partialorder %v1677, 8.507059e+37
    %v1679 = vand.u32 %v1188, 2147483648
    %v1680 = vor.u32 1.1754944e-38, %v1679
    %v1681 = vsel %vm1678, %v1680, %v1676
    %v1682 = vmul.f32 %v1539, %v1681
    %v1683 = vrcp.pop %v1191
    %v1684 = vmul.f32 %v1191, %v1683
    %v1685 = vsub.f32 1.0, %v1684
    %v1686 = vmul.f32 %v1683, %v1685
    %v1687 = vadd.f32 %v1683, %v1686
    %vm1688 = vweird.f32 %v1191
    %vm1689 = vweird.f32 %v1683
    %vm1690 = vmor %vm1688, %vm1689
    %v1691 = vsel %vm1690, %v1683, %v1687
    %v1692 = vand.u32 2147483647, %v1191
    %vm1693 = vcmp.eq.f32.partialorder %v1692, 8.507059e+37
    %v1694 = vand.u32 %v1191, 2147483648
    %v1695 = vor.u32 1.1754944e-38, %v1694
    %v1696 = vsel %vm1693, %v1695, %v1691
    %v1697 = vmul.f32 %v1541, %v1696
    %v1698 = vrcp.pop %v1194
    %v1699 = vmul.f32 %v1194, %v1698
    %v1700 = vsub.f32 1.0, %v1699
    %v1701 = vmul.f32 %v1698, %v1700
    %v1702 = vadd.f32 %v1698, %v1701
    %vm1703 = vweird.f32 %v1194
    %vm1704 = vweird.f32 %v1698
    %vm1705 = vmor %vm1703, %vm1704
    %v1706 = vsel %vm1705, %v1698, %v1702
    %v1707 = vand.u32 2147483647, %v1194
    %vm1708 = vcmp.eq.f32.partialorder %v1707, 8.507059e+37
    %v1709 = vand.u32 %v1194, 2147483648
    %v1710 = vor.u32 1.1754944e-38, %v1709
    %v1711 = vsel %vm1708, %v1710, %v1706
    %v1712 = vmul.f32 %v1544, %v1711
    %v1713 = vrcp.pop %v1197
    %v1714 = vmul.f32 %v1197, %v1713
    %v1715 = vsub.f32 1.0, %v1714
    %v1716 = vmul.f32 %v1713, %v1715
    %v1717 = vadd.f32 %v1713, %v1716
    %vm1718 = vweird.f32 %v1197
    %vm1719 = vweird.f32 %v1713
    %vm1720 = vmor %vm1718, %vm1719
    %v1721 = vsel %vm1720, %v1713, %v1717
    %v1722 = vand.u32 2147483647, %v1197
    %vm1723 = vcmp.eq.f32.partialorder %v1722, 8.507059e+37
    %v1724 = vand.u32 %v1197, 2147483648
    %v1725 = vor.u32 1.1754944e-38, %v1724
    %v1726 = vsel %vm1723, %v1725, %v1721
    %v1727 = vmul.f32 %v1546, %v1726
    %v1728 = vrcp.pop %v1200
    %v1729 = vmul.f32 %v1200, %v1728
    %v1730 = vsub.f32 1.0, %v1729
    %v1731 = vmul.f32 %v1728, %v1730
    %v1732 = vadd.f32 %v1728, %v1731
    %vm1733 = vweird.f32 %v1200
    %vm1734 = vweird.f32 %v1728
    %vm1735 = vmor %vm1733, %vm1734
    %v1736 = vsel %vm1735, %v1728, %v1732
    %v1737 = vand.u32 2147483647, %v1200
    %vm1738 = vcmp.eq.f32.partialorder %v1737, 8.507059e+37
    %v1739 = vand.u32 %v1200, 2147483648
    %v1740 = vor.u32 1.1754944e-38, %v1739
    %v1741 = vsel %vm1738, %v1740, %v1736
    %v1742 = vmul.f32 %v1549, %v1741
    %v1743 = vrcp.pop %v1203
    %v1744 = vmul.f32 %v1203, %v1743
    %v1745 = vsub.f32 1.0, %v1744
    %v1746 = vmul.f32 %v1743, %v1745
    %v1747 = vadd.f32 %v1743, %v1746
    %vm1748 = vweird.f32 %v1203
    %vm1749 = vweird.f32 %v1743
    %vm1750 = vmor %vm1748, %vm1749
    %v1751 = vsel %vm1750, %v1743, %v1747
    %v1752 = vand.u32 2147483647, %v1203
    %vm1753 = vcmp.eq.f32.partialorder %v1752, 8.507059e+37
    %v1754 = vand.u32 %v1203, 2147483648
    %v1755 = vor.u32 1.1754944e-38, %v1754
    %v1756 = vsel %vm1753, %v1755, %v1751
    %v1757 = vmul.f32 %v1551, %v1756
    %v1758 = vrcp.pop %v1206
    %v1759 = vmul.f32 %v1206, %v1758
    %v1760 = vsub.f32 1.0, %v1759
    %v1761 = vmul.f32 %v1758, %v1760
    %v1762 = vadd.f32 %v1758, %v1761
    %vm1763 = vweird.f32 %v1206
    %vm1764 = vweird.f32 %v1758
    %vm1765 = vmor %vm1763, %vm1764
    %v1766 = vsel %vm1765, %v1758, %v1762
    %v1767 = vand.u32 2147483647, %v1206
    %vm1768 = vcmp.eq.f32.partialorder %v1767, 8.507059e+37
    %v1769 = vand.u32 %v1206, 2147483648
    %v1770 = vor.u32 1.1754944e-38, %v1769
    %v1771 = vsel %vm1768, %v1770, %v1766
    %v1772 = vmul.f32 %v1554, %v1771
    %v1773 = vrcp.pop %v1209
    %v1774 = vmul.f32 %v1209, %v1773
    %v1775 = vsub.f32 1.0, %v1774
    %v1776 = vmul.f32 %v1773, %v1775
    %v1777 = vadd.f32 %v1773, %v1776
    %vm1778 = vweird.f32 %v1209
    %vm1779 = vweird.f32 %v1773
    %vm1780 = vmor %vm1778, %vm1779
    %v1781 = vsel %vm1780, %v1773, %v1777
    %v1782 = vand.u32 2147483647, %v1209
    %vm1783 = vcmp.eq.f32.partialorder %v1782, 8.507059e+37
    %v1784 = vand.u32 %v1209, 2147483648
    %v1785 = vor.u32 1.1754944e-38, %v1784
    %v1786 = vsel %vm1783, %v1785, %v1781
    %v1787 = vmul.f32 %v1556, %v1786
    %v1788 = vrcp.pop %v1212
    %v1789 = vmul.f32 %v1212, %v1788
    %v1790 = vsub.f32 1.0, %v1789
    %v1791 = vmul.f32 %v1788, %v1790
    %v1792 = vadd.f32 %v1788, %v1791
    %vm1793 = vweird.f32 %v1212
    %vm1794 = vweird.f32 %v1788
    %vm1795 = vmor %vm1793, %vm1794
    %v1796 = vsel %vm1795, %v1788, %v1792
    %v1797 = vand.u32 2147483647, %v1212
    %vm1798 = vcmp.eq.f32.partialorder %v1797, 8.507059e+37
    %v1799 = vand.u32 %v1212, 2147483648
    %v1800 = vor.u32 1.1754944e-38, %v1799
    %v1801 = vsel %vm1798, %v1800, %v1796
    %v1802 = vmul.f32 %v1559, %v1801
    %v1803 = vrcp.pop %v1215
    %v1804 = vmul.f32 %v1215, %v1803
    %v1805 = vsub.f32 1.0, %v1804
    %v1806 = vmul.f32 %v1803, %v1805
    %v1807 = vadd.f32 %v1803, %v1806
    %vm1808 = vweird.f32 %v1215
    %vm1809 = vweird.f32 %v1803
    %vm1810 = vmor %vm1808, %vm1809
    %v1811 = vsel %vm1810, %v1803, %v1807
    %v1812 = vand.u32 2147483647, %v1215
    %vm1813 = vcmp.eq.f32.partialorder %v1812, 8.507059e+37
    %v1814 = vand.u32 %v1215, 2147483648
    %v1815 = vor.u32 1.1754944e-38, %v1814
    %v1816 = vsel %vm1813, %v1815, %v1811
    %v1817 = vmul.f32 %v1561, %v1816
    %v1818 = vrcp.pop %v1218
    %v1819 = vmul.f32 %v1218, %v1818
    %v1820 = vsub.f32 1.0, %v1819
    %v1821 = vmul.f32 %v1818, %v1820
    %v1822 = vadd.f32 %v1818, %v1821
    %vm1823 = vweird.f32 %v1218
    %vm1824 = vweird.f32 %v1818
    %vm1825 = vmor %vm1823, %vm1824
    %v1826 = vsel %vm1825, %v1818, %v1822
    %v1827 = vand.u32 2147483647, %v1218
    %vm1828 = vcmp.eq.f32.partialorder %v1827, 8.507059e+37
    %v1829 = vand.u32 %v1218, 2147483648
    %v1830 = vor.u32 1.1754944e-38, %v1829
    %v1831 = vsel %vm1828, %v1830, %v1826
    %v1832 = vmul.f32 %v1564, %v1831
    %v1833 = vrcp.pop %v1221
    %v1834 = vmul.f32 %v1221, %v1833
    %v1835 = vsub.f32 1.0, %v1834
    %v1836 = vmul.f32 %v1833, %v1835
    %v1837 = vadd.f32 %v1833, %v1836
    %vm1838 = vweird.f32 %v1221
    %vm1839 = vweird.f32 %v1833
    %vm1840 = vmor %vm1838, %vm1839
    %v1841 = vsel %vm1840, %v1833, %v1837
    %v1842 = vand.u32 2147483647, %v1221
    %vm1843 = vcmp.eq.f32.partialorder %v1842, 8.507059e+37
    %v1844 = vand.u32 %v1221, 2147483648
    %v1845 = vor.u32 1.1754944e-38, %v1844
    %v1846 = vsel %vm1843, %v1845, %v1841
    %v1847 = vmul.f32 %v1566, %v1846
    %v1848 = vrcp.pop %v1224
    %v1849 = vmul.f32 %v1224, %v1848
    %v1850 = vsub.f32 1.0, %v1849
    %v1851 = vmul.f32 %v1848, %v1850
    %v1852 = vadd.f32 %v1848, %v1851
    %vm1853 = vweird.f32 %v1224
    %vm1854 = vweird.f32 %v1848
    %vm1855 = vmor %vm1853, %vm1854
    %v1856 = vsel %vm1855, %v1848, %v1852
    %v1857 = vand.u32 2147483647, %v1224
    %vm1858 = vcmp.eq.f32.partialorder %v1857, 8.507059e+37
    %v1859 = vand.u32 %v1224, 2147483648
    %v1860 = vor.u32 1.1754944e-38, %v1859
    %v1861 = vsel %vm1858, %v1860, %v1856
    %v1862 = vmul.f32 %v1569, %v1861
    %v1863 = vrcp.pop %v1227
    %v1864 = vmul.f32 %v1227, %v1863
    %v1865 = vsub.f32 1.0, %v1864
    %v1866 = vmul.f32 %v1863, %v1865
    %v1867 = vadd.f32 %v1863, %v1866
    %vm1868 = vweird.f32 %v1227
    %vm1869 = vweird.f32 %v1863
    %vm1870 = vmor %vm1868, %vm1869
    %v1871 = vsel %vm1870, %v1863, %v1867
    %v1872 = vand.u32 2147483647, %v1227
    %vm1873 = vcmp.eq.f32.partialorder %v1872, 8.507059e+37
    %v1874 = vand.u32 %v1227, 2147483648
    %v1875 = vor.u32 1.1754944e-38, %v1874
    %v1876 = vsel %vm1873, %v1875, %v1871
    %v1877 = vmul.f32 %v1571, %v1876
    %v1878 = vrcp.pop %v1230
    %v1879 = vmul.f32 %v1230, %v1878
    %v1880 = vsub.f32 1.0, %v1879
    %v1881 = vmul.f32 %v1878, %v1880
    %v1882 = vadd.f32 %v1878, %v1881
    %vm1883 = vweird.f32 %v1230
    %vm1884 = vweird.f32 %v1878
    %vm1885 = vmor %vm1883, %vm1884
    %v1886 = vsel %vm1885, %v1878, %v1882
    %v1887 = vand.u32 2147483647, %v1230
    %vm1888 = vcmp.eq.f32.partialorder %v1887, 8.507059e+37
    %v1889 = vand.u32 %v1230, 2147483648
    %v1890 = vor.u32 1.1754944e-38, %v1889
    %v1891 = vsel %vm1888, %v1890, %v1886
    %v1892 = vmul.f32 %v1574, %v1891
    %v1893 = vrcp.pop %v1233
    %v1894 = vmul.f32 %v1233, %v1893
    %v1895 = vsub.f32 1.0, %v1894
    %v1896 = vmul.f32 %v1893, %v1895
    %v1897 = vadd.f32 %v1893, %v1896
    %vm1898 = vweird.f32 %v1233
    %vm1899 = vweird.f32 %v1893
    %vm1900 = vmor %vm1898, %vm1899
    %v1901 = vsel %vm1900, %v1893, %v1897
    %v1902 = vand.u32 2147483647, %v1233
    %vm1903 = vcmp.eq.f32.partialorder %v1902, 8.507059e+37
    %v1904 = vand.u32 %v1233, 2147483648
    %v1905 = vor.u32 1.1754944e-38, %v1904
    %v1906 = vsel %vm1903, %v1905, %v1901
    %v1907 = vmul.f32 %v1576, %v1906
    %v1908 = vrcp.pop %v1236
    %v1909 = vmul.f32 %v1236, %v1908
    %v1910 = vsub.f32 1.0, %v1909
    %v1911 = vmul.f32 %v1908, %v1910
    %v1912 = vadd.f32 %v1908, %v1911
    %vm1913 = vweird.f32 %v1236
    %vm1914 = vweird.f32 %v1908
    %vm1915 = vmor %vm1913, %vm1914
    %v1916 = vsel %vm1915, %v1908, %v1912
    %v1917 = vand.u32 2147483647, %v1236
    %vm1918 = vcmp.eq.f32.partialorder %v1917, 8.507059e+37
    %v1919 = vand.u32 %v1236, 2147483648
    %v1920 = vor.u32 1.1754944e-38, %v1919
    %v1921 = vsel %vm1918, %v1920, %v1916
    %v1922 = vmul.f32 %v1579, %v1921
    %v1923 = vrcp.pop %v1239
    %v1924 = vmul.f32 %v1239, %v1923
    %v1925 = vsub.f32 1.0, %v1924
    %v1926 = vmul.f32 %v1923, %v1925
    %v1927 = vadd.f32 %v1923, %v1926
    %vm1928 = vweird.f32 %v1239
    %vm1929 = vweird.f32 %v1923
    %vm1930 = vmor %vm1928, %vm1929
    %v1931 = vsel %vm1930, %v1923, %v1927
    %v1932 = vand.u32 2147483647, %v1239
    %vm1933 = vcmp.eq.f32.partialorder %v1932, 8.507059e+37
    %v1934 = vand.u32 %v1239, 2147483648
    %v1935 = vor.u32 1.1754944e-38, %v1934
    %v1936 = vsel %vm1933, %v1935, %v1931
    %v1937 = vmul.f32 %v1581, %v1936
    %v1938 = vrcp.pop %v1242
    %v1939 = vmul.f32 %v1242, %v1938
    %v1940 = vsub.f32 1.0, %v1939
    %v1941 = vmul.f32 %v1938, %v1940
    %v1942 = vadd.f32 %v1938, %v1941
    %vm1943 = vweird.f32 %v1242
    %vm1944 = vweird.f32 %v1938
    %vm1945 = vmor %vm1943, %vm1944
    %v1946 = vsel %vm1945, %v1938, %v1942
    %v1947 = vand.u32 2147483647, %v1242
    %vm1948 = vcmp.eq.f32.partialorder %v1947, 8.507059e+37
    %v1949 = vand.u32 %v1242, 2147483648
    %v1950 = vor.u32 1.1754944e-38, %v1949
    %v1951 = vsel %vm1948, %v1950, %v1946
    %v1952 = vmul.f32 %v1584, %v1951
    %v1953 = vrcp.pop %v1245
    %v1954 = vmul.f32 %v1245, %v1953
    %v1955 = vsub.f32 1.0, %v1954
    %v1956 = vmul.f32 %v1953, %v1955
    %v1957 = vadd.f32 %v1953, %v1956
    %vm1958 = vweird.f32 %v1245
    %vm1959 = vweird.f32 %v1953
    %vm1960 = vmor %vm1958, %vm1959
    %v1961 = vsel %vm1960, %v1953, %v1957
    %v1962 = vand.u32 2147483647, %v1245
    %vm1963 = vcmp.eq.f32.partialorder %v1962, 8.507059e+37
    %v1964 = vand.u32 %v1245, 2147483648
    %v1965 = vor.u32 1.1754944e-38, %v1964
    %v1966 = vsel %vm1963, %v1965, %v1961
    %v1967 = vmul.f32 %v1586, %v1966
    %v1968 = vrcp.pop %v1248
    %v1969 = vmul.f32 %v1248, %v1968
    %v1970 = vsub.f32 1.0, %v1969
    %v1971 = vmul.f32 %v1968, %v1970
    %v1972 = vadd.f32 %v1968, %v1971
    %vm1973 = vweird.f32 %v1248
    %vm1974 = vweird.f32 %v1968
    %vm1975 = vmor %vm1973, %vm1974
    %v1976 = vsel %vm1975, %v1968, %v1972
    %v1977 = vand.u32 2147483647, %v1248
    %vm1978 = vcmp.eq.f32.partialorder %v1977, 8.507059e+37
    %v1979 = vand.u32 %v1248, 2147483648
    %v1980 = vor.u32 1.1754944e-38, %v1979
    %v1981 = vsel %vm1978, %v1980, %v1976
    %v1982 = vmul.f32 %v1589, %v1981
    %v1983 = vrcp.pop %v1251
    %v1984 = vmul.f32 %v1251, %v1983
    %v1985 = vsub.f32 1.0, %v1984
    %v1986 = vmul.f32 %v1983, %v1985
    %v1987 = vadd.f32 %v1983, %v1986
    %vm1988 = vweird.f32 %v1251
    %vm1989 = vweird.f32 %v1983
    %vm1990 = vmor %vm1988, %vm1989
    %v1991 = vsel %vm1990, %v1983, %v1987
    %v1992 = vand.u32 2147483647, %v1251
    %vm1993 = vcmp.eq.f32.partialorder %v1992, 8.507059e+37
    %v1994 = vand.u32 %v1251, 2147483648
    %v1995 = vor.u32 1.1754944e-38, %v1994
    %v1996 = vsel %vm1993, %v1995, %v1991
    %v1997 = vmul.f32 %v1591, %v1996
    %v1998 = vrcp.pop %v1254
    %v1999 = vmul.f32 %v1254, %v1998
    %v2000 = vsub.f32 1.0, %v1999
    %v2001 = vmul.f32 %v1998, %v2000
    %v2002 = vadd.f32 %v1998, %v2001
    %vm2003 = vweird.f32 %v1254
    %vm2004 = vweird.f32 %v1998
    %vm2005 = vmor %vm2003, %vm2004
    %v2006 = vsel %vm2005, %v1998, %v2002
    %v2007 = vand.u32 2147483647, %v1254
    %vm2008 = vcmp.eq.f32.partialorder %v2007, 8.507059e+37
    %v2009 = vand.u32 %v1254, 2147483648
    %v2010 = vor.u32 1.1754944e-38, %v2009
    %v2011 = vsel %vm2008, %v2010, %v2006
    %v2012 = vmul.f32 %v1594, %v2011
    %v2013 = vrcp.pop %v1257
    %v2014 = vmul.f32 %v1257, %v2013
    %v2015 = vsub.f32 1.0, %v2014
    %v2016 = vmul.f32 %v2013, %v2015
    %v2017 = vadd.f32 %v2013, %v2016
    %vm2018 = vweird.f32 %v1257
    %vm2019 = vweird.f32 %v2013
    %vm2020 = vmor %vm2018, %vm2019
    %v2021 = vsel %vm2020, %v2013, %v2017
    %v2022 = vand.u32 2147483647, %v1257
    %vm2023 = vcmp.eq.f32.partialorder %v2022, 8.507059e+37
    %v2024 = vand.u32 %v1257, 2147483648
    %v2025 = vor.u32 1.1754944e-38, %v2024
    %v2026 = vsel %vm2023, %v2025, %v2021
    %v2027 = vmul.f32 %v1596, %v2026
    %v2028 = vrcp.pop %v1260
    %v2029 = vmul.f32 %v1260, %v2028
    %v2030 = vsub.f32 1.0, %v2029
    %v2031 = vmul.f32 %v2028, %v2030
    %v2032 = vadd.f32 %v2028, %v2031
    %vm2033 = vweird.f32 %v1260
    %vm2034 = vweird.f32 %v2028
    %vm2035 = vmor %vm2033, %vm2034
    %v2036 = vsel %vm2035, %v2028, %v2032
    %v2037 = vand.u32 2147483647, %v1260
    %vm2038 = vcmp.eq.f32.partialorder %v2037, 8.507059e+37
    %v2039 = vand.u32 %v1260, 2147483648
    %v2040 = vor.u32 1.1754944e-38, %v2039
    %v2041 = vsel %vm2038, %v2040, %v2036
    %v2042 = vmul.f32 %v1599, %v2041
    %v2043 = vrcp.pop %v1263
    %v2044 = vmul.f32 %v1263, %v2043
    %v2045 = vsub.f32 1.0, %v2044
    %v2046 = vmul.f32 %v2043, %v2045
    %v2047 = vadd.f32 %v2043, %v2046
    %vm2048 = vweird.f32 %v1263
    %vm2049 = vweird.f32 %v2043
    %vm2050 = vmor %vm2048, %vm2049
    %v2051 = vsel %vm2050, %v2043, %v2047
    %v2052 = vand.u32 2147483647, %v1263
    %vm2053 = vcmp.eq.f32.partialorder %v2052, 8.507059e+37
    %v2054 = vand.u32 %v1263, 2147483648
    %v2055 = vor.u32 1.1754944e-38, %v2054
    %v2056 = vsel %vm2053, %v2055, %v2051
    %v2057 = vmul.f32 %v1601, %v2056
    %v2058 = vrcp.pop %v1266
    %v2059 = vmul.f32 %v1266, %v2058
    %v2060 = vsub.f32 1.0, %v2059
    %v2061 = vmul.f32 %v2058, %v2060
    %v2062 = vadd.f32 %v2058, %v2061
    %vm2063 = vweird.f32 %v1266
    %vm2064 = vweird.f32 %v2058
    %vm2065 = vmor %vm2063, %vm2064
    %v2066 = vsel %vm2065, %v2058, %v2062
    %v2067 = vand.u32 2147483647, %v1266
    %vm2068 = vcmp.eq.f32.partialorder %v2067, 8.507059e+37
    %v2069 = vand.u32 %v1266, 2147483648
    %v2070 = vor.u32 1.1754944e-38, %v2069
    %v2071 = vsel %vm2068, %v2070, %v2066
    %v2072 = vmul.f32 %v1604, %v2071
    %v2073 = vrcp.pop %v1269
    %v2074 = vmul.f32 %v1269, %v2073
    %v2075 = vsub.f32 1.0, %v2074
    %v2076 = vmul.f32 %v2073, %v2075
    %v2077 = vadd.f32 %v2073, %v2076
    %vm2078 = vweird.f32 %v1269
    %vm2079 = vweird.f32 %v2073
    %vm2080 = vmor %vm2078, %vm2079
    %v2081 = vsel %vm2080, %v2073, %v2077
    %v2082 = vand.u32 2147483647, %v1269
    %vm2083 = vcmp.eq.f32.partialorder %v2082, 8.507059e+37
    %v2084 = vand.u32 %v1269, 2147483648
    %v2085 = vor.u32 1.1754944e-38, %v2084
    %v2086 = vsel %vm2083, %v2085, %v2081
    %v2087 = vmul.f32 %v1606, %v2086
    %vm2088 = vcmp.le.f32.partialorder %v888, -5e+29
    %vm2089 = vcmp.le.f32.partialorder %v891, -5e+29
    %vm2090 = vcmp.le.f32.partialorder %v894, -5e+29
    %vm2091 = vcmp.le.f32.partialorder %v897, -5e+29
    %vm2092 = vcmp.le.f32.partialorder %v900, -5e+29
    %vm2093 = vcmp.le.f32.partialorder %v903, -5e+29
    %vm2094 = vcmp.le.f32.partialorder %v906, -5e+29
    %vm2095 = vcmp.le.f32.partialorder %v909, -5e+29
    %vm2096 = vcmp.le.f32.partialorder %v912, -5e+29
    %vm2097 = vcmp.le.f32.partialorder %v915, -5e+29
    %vm2098 = vcmp.le.f32.partialorder %v918, -5e+29
    %vm2099 = vcmp.le.f32.partialorder %v921, -5e+29
    %vm2100 = vcmp.le.f32.partialorder %v924, -5e+29
    %vm2101 = vcmp.le.f32.partialorder %v927, -5e+29
    %vm2102 = vcmp.le.f32.partialorder %v930, -5e+29
    %vm2103 = vcmp.le.f32.partialorder %v933, -5e+29
    %vm2104 = vcmp.le.f32.partialorder %v936, -5e+29
    %vm2105 = vcmp.le.f32.partialorder %v939, -5e+29
    %vm2106 = vcmp.le.f32.partialorder %v942, -5e+29
    %vm2107 = vcmp.le.f32.partialorder %v945, -5e+29
    %vm2108 = vcmp.le.f32.partialorder %v948, -5e+29
    %vm2109 = vcmp.le.f32.partialorder %v951, -5e+29
    %vm2110 = vcmp.le.f32.partialorder %v954, -5e+29
    %vm2111 = vcmp.le.f32.partialorder %v957, -5e+29
    %vm2112 = vcmp.le.f32.partialorder %v960, -5e+29
    %vm2113 = vcmp.le.f32.partialorder %v963, -5e+29
    %vm2114 = vcmp.le.f32.partialorder %v966, -5e+29
    %vm2115 = vcmp.le.f32.partialorder %v969, -5e+29
    %vm2116 = vcmp.le.f32.partialorder %v972, -5e+29
    %vm2117 = vcmp.le.f32.partialorder %v975, -5e+29
    %vm2118 = vcmp.le.f32.partialorder %v978, -5e+29
    %vm2119 = vcmp.le.f32.partialorder %v981, -5e+29
    %v2120 = vsel %vm2088, 1, 0
    %v2121 = vsel %vm2089, 1, 0
    %v2122 = vsel %vm2090, 1, 0
    %v2123 = vsel %vm2091, 1, 0
    %v2124 = vsel %vm2092, 1, 0
    %v2125 = vsel %vm2093, 1, 0
    %v2126 = vsel %vm2094, 1, 0
    %v2127 = vsel %vm2095, 1, 0
    %v2128 = vsel %vm2096, 1, 0
    %v2129 = vsel %vm2097, 1, 0
    %v2130 = vsel %vm2098, 1, 0
    %v2131 = vsel %vm2099, 1, 0
    %v2132 = vsel %vm2100, 1, 0
    %v2133 = vsel %vm2101, 1, 0
    %v2134 = vsel %vm2102, 1, 0
    %v2135 = vsel %vm2103, 1, 0
    %v2136 = vsel %vm2104, 1, 0
    %v2137 = vsel %vm2105, 1, 0
    %v2138 = vsel %vm2106, 1, 0
    %v2139 = vsel %vm2107, 1, 0
    %v2140 = vsel %vm2108, 1, 0
    %v2141 = vsel %vm2109, 1, 0
    %v2142 = vsel %vm2110, 1, 0
    %v2143 = vsel %vm2111, 1, 0
    %v2144 = vsel %vm2112, 1, 0
    %v2145 = vsel %vm2113, 1, 0
    %v2146 = vsel %vm2114, 1, 0
    %v2147 = vsel %vm2115, 1, 0
    %v2148 = vsel %vm2116, 1, 0
    %v2149 = vsel %vm2117, 1, 0
    %v2150 = vsel %vm2118, 1, 0
    %v2151 = vsel %vm2119, 1, 0
    %vm2152 = vcmp.eq.s32.totalorder %v2120, 1
    %vm2153 = vcmp.eq.s32.totalorder %v2121, 1
    %vm2154 = vcmp.eq.s32.totalorder %v2122, 1
    %vm2155 = vcmp.eq.s32.totalorder %v2123, 1
    %vm2156 = vcmp.eq.s32.totalorder %v2124, 1
    %vm2157 = vcmp.eq.s32.totalorder %v2125, 1
    %vm2158 = vcmp.eq.s32.totalorder %v2126, 1
    %vm2159 = vcmp.eq.s32.totalorder %v2127, 1
    %vm2160 = vcmp.eq.s32.totalorder %v2128, 1
    %vm2161 = vcmp.eq.s32.totalorder %v2129, 1
    %vm2162 = vcmp.eq.s32.totalorder %v2130, 1
    %vm2163 = vcmp.eq.s32.totalorder %v2131, 1
    %vm2164 = vcmp.eq.s32.totalorder %v2132, 1
    %vm2165 = vcmp.eq.s32.totalorder %v2133, 1
    %vm2166 = vcmp.eq.s32.totalorder %v2134, 1
    %vm2167 = vcmp.eq.s32.totalorder %v2135, 1
    %vm2168 = vcmp.eq.s32.totalorder %v2136, 1
    %vm2169 = vcmp.eq.s32.totalorder %v2137, 1
    %vm2170 = vcmp.eq.s32.totalorder %v2138, 1
    %vm2171 = vcmp.eq.s32.totalorder %v2139, 1
    %vm2172 = vcmp.eq.s32.totalorder %v2140, 1
    %vm2173 = vcmp.eq.s32.totalorder %v2141, 1
    %vm2174 = vcmp.eq.s32.totalorder %v2142, 1
    %vm2175 = vcmp.eq.s32.totalorder %v2143, 1
    %vm2176 = vcmp.eq.s32.totalorder %v2144, 1
    %vm2177 = vcmp.eq.s32.totalorder %v2145, 1
    %vm2178 = vcmp.eq.s32.totalorder %v2146, 1
    %vm2179 = vcmp.eq.s32.totalorder %v2147, 1
    %vm2180 = vcmp.eq.s32.totalorder %v2148, 1
    %vm2181 = vcmp.eq.s32.totalorder %v2149, 1
    %vm2182 = vcmp.eq.s32.totalorder %v2150, 1
    %vm2183 = vcmp.eq.s32.totalorder %v2151, 1
    %v2184 = vsel %vm2152, nan, %v1622
    %v2185 = vsel %vm2153, nan, %v1637
    %v2186 = vsel %vm2154, nan, %v1652
    %v2187 = vsel %vm2155, nan, %v1667
    %v2188 = vsel %vm2156, nan, %v1682
    %v2189 = vsel %vm2157, nan, %v1697
    %v2190 = vsel %vm2158, nan, %v1712
    %v2191 = vsel %vm2159, nan, %v1727
    %v2192 = vsel %vm2160, nan, %v1742
    %v2193 = vsel %vm2161, nan, %v1757
    %v2194 = vsel %vm2162, nan, %v1772
    %v2195 = vsel %vm2163, nan, %v1787
    %v2196 = vsel %vm2164, nan, %v1802
    %v2197 = vsel %vm2165, nan, %v1817
    %v2198 = vsel %vm2166, nan, %v1832
    %v2199 = vsel %vm2167, nan, %v1847
    %v2200 = vsel %vm2168, nan, %v1862
    %v2201 = vsel %vm2169, nan, %v1877
    %v2202 = vsel %vm2170, nan, %v1892
    %v2203 = vsel %vm2171, nan, %v1907
    %v2204 = vsel %vm2172, nan, %v1922
    %v2205 = vsel %vm2173, nan, %v1937
    %v2206 = vsel %vm2174, nan, %v1952
    %v2207 = vsel %vm2175, nan, %v1967
    %v2208 = vsel %vm2176, nan, %v1982
    %v2209 = vsel %vm2177, nan, %v1997
    %v2210 = vsel %vm2178, nan, %v2012
    %v2211 = vsel %vm2179, nan, %v2027
    %v2212 = vsel %vm2180, nan, %v2042
    %v2213 = vsel %vm2181, nan, %v2057
    %v2214 = vsel %vm2182, nan, %v2072
    %v2215 = vsel %vm2183, nan, %v2087
    %2216 = vst [vmem:[#allocation2] sm:$0xff] %v2184
    %2217 = vst [vmem:[#allocation2 + $0x8] sm:$0xff] %v2185
    %2218 = vst [vmem:[#allocation2 + $0x10] sm:$0xff] %v2186
    %2219 = vst [vmem:[#allocation2 + $0x18] sm:$0xff] %v2187
    %2220 = vst [vmem:[#allocation2 + $0x20] sm:$0xff] %v2188
    %2221 = vst [vmem:[#allocation2 + $0x28] sm:$0xff] %v2189
    %2222 = vst [vmem:[#allocation2 + $0x30] sm:$0xff] %v2190
    %2223 = vst [vmem:[#allocation2 + $0x38] sm:$0xff] %v2191
    %2224 = vst [vmem:[#allocation2 + $0x40] sm:$0xff] %v2192
    %2225 = vst [vmem:[#allocation2 + $0x48] sm:$0xff] %v2193
    %2226 = vst [vmem:[#allocation2 + $0x50] sm:$0xff] %v2194
    %2227 = vst [vmem:[#allocation2 + $0x58] sm:$0xff] %v2195
    %2228 = vst [vmem:[#allocation2 + $0x60] sm:$0xff] %v2196
    %2229 = vst [vmem:[#allocation2 + $0x68] sm:$0xff] %v2197
    %2230 = vst [vmem:[#allocation2 + $0x70] sm:$0xff] %v2198
    %2231 = vst [vmem:[#allocation2 + $0x78] sm:$0xff] %v2199
    %2232 = vst [vmem:[#allocation2 + $0x80] sm:$0xff] %v2200
    %2233 = vst [vmem:[#allocation2 + $0x88] sm:$0xff] %v2201
    %2234 = vst [vmem:[#allocation2 + $0x90] sm:$0xff] %v2202
    %2235 = vst [vmem:[#allocation2 + $0x98] sm:$0xff] %v2203
    %2236 = vst [vmem:[#allocation2 + $0xa0] sm:$0xff] %v2204
    %2237 = vst [vmem:[#allocation2 + $0xa8] sm:$0xff] %v2205
    %2238 = vst [vmem:[#allocation2 + $0xb0] sm:$0xff] %v2206
    %2239 = vst [vmem:[#allocation2 + $0xb8] sm:$0xff] %v2207
    %2240 = vst [vmem:[#allocation2 + $0xc0] sm:$0xff] %v2208
    %2241 = vst [vmem:[#allocation2 + $0xc8] sm:$0xff] %v2209
    %2242 = vst [vmem:[#allocation2 + $0xd0] sm:$0xff] %v2210
    %2243 = vst [vmem:[#allocation2 + $0xd8] sm:$0xff] %v2211
    %2244 = vst [vmem:[#allocation2 + $0xe0] sm:$0xff] %v2212
    %2245 = vst [vmem:[#allocation2 + $0xe8] sm:$0xff] %v2213
    %2246 = vst [vmem:[#allocation2 + $0xf0] sm:$0xff] %v2214
    %2247 = vst [vmem:[#allocation2 + $0xf8] sm:$0xff] %v2215
    // Predicated region
    $region18: #{hypergraph_attention.1} parent=1 // pred_check
      _
    $region19: #{hypergraph_attention.1} parent=1 // pred_check_branch
      %2249 = sbr.rel (0) target = $region21
    $region20: #{hypergraph_attention.1} parent=1 // pred_region
      %2251 = vsyncadd [#allocation3], 0
      %s2252 = sshll.u32 [#allocation2], 4
      %s2253 = int_to_ptr.vmem [resolvable:$true] %s2252
      %s2254 = sshll.u32 %s4, 4
      %s2255 = int_to_ptr.hbm [resolvable:$true] %s2254
      %2260 = dma.vmem_to_hbm [thread:$0]  %s2253, 4096, %s2255, [#allocation3], 128, 128, 8
    $region21: #{hypergraph_attention.1} parent=1 // pred_fallthru
      _
    // Predicated region
    $region22: #{hypergraph_attention.1} parent=1 // pred_check
      _
    $region23: #{hypergraph_attention.1} parent=1 // pred_check_branch
      %2262 = sbr.rel (0) target = $region25
    $region24: #{hypergraph_attention.1} parent=1 // pred_region
      %2264 = dma.done [#allocation3], 4096
    $region25: #{hypergraph_attention.1} parent=1 // pred_fallthru
      _
    %2265 = vsyncpa [#allocation3], 1

</llo_original>
